<compile_context>
chip_gen: v7x
topology: tpu7x:2x2x1
jax: 0.10.0
libtpu: 0.0.40
codegen_flags: <defaults>
</compile_context>

<pallas_src>
import functools

import jax
import jax.numpy as jnp
from jax import lax
from jax.experimental import pallas as pl
from jax.experimental.pallas import tpu as pltpu


def _shift_cols(p, s):
    """out[:, q] = p[:, q + s] if 0 <= q + s < HW else 0 (flat shift, zero fill)."""
    if s == 0:
        return p
    n = p.shape[-1]
    z = jnp.zeros(p.shape[:-1] + (abs(s),), p.dtype)
    if s > 0:
        return jnp.concatenate([p[:, s:], z], axis=-1)
    return jnp.concatenate([z, p[:, : n + s]], axis=-1)


def _fused_kernel(x_ref, p_ref, o_ref, stack_ref, *, H, W, cout, nb):
    """x_ref: (1, nb, H*W)  p_ref: (cout, 9 + 18*cout + 3)  o_ref: (1, nb, cout, H*W)
    stack_ref: VMEM (9*cout, H*W) im2col tap-stack scratch (shared by all layers/images)."""
    hw = H * W
    f32 = jnp.float32
    taps = [(oy, ox) for oy in (-1, 0, 1) for ox in (-1, 0, 1)]

    # Source-column keep-masks (built once, shared by all taps / layers / images):
    #  - taps reading x-1 (ox=-1) must ignore the LAST column of every image row,
    #  - taps reading x+1 (ox=+1) must ignore the FIRST column of every image row.
    # Vertical out-of-range reads fall off the ends of the flat plane and are zero-filled
    # by _shift_cols, so no per-tap mask is needed.
    def make_masks(rows):
        colmod = lax.broadcasted_iota(jnp.int32, (rows, hw), 1) % W
        return colmod != (W - 1), colmod != 0

    mL_c, mR_c = make_masks(cout)                      # for (cout, hw) activations
    mL_n, mR_n = (mL_c, mR_c) if nb == cout else make_masks(nb)   # for the (nb, hw) input

    # --- unpack the fused parameter slab: [w0 (9) | w1 (9*cout) | w2 (9*cout) | b0 b1 b2]
    c9 = 9 * cout
    w0 = p_ref[:, 0:9]
    w1 = p_ref[:, 9:9 + c9]
    w2 = p_ref[:, 9 + c9:9 + 2 * c9]
    boff = 9 + 2 * c9
    b0 = jnp.broadcast_to(p_ref[:, boff + 0:boff + 1], (cout, hw))   # hoisted broadcasts
    b1 = jnp.broadcast_to(p_ref[:, boff + 1:boff + 2], (cout, hw))
    b2 = jnp.broadcast_to(p_ref[:, boff + 2:boff + 3], (cout, hw))

    def variants(a, mL, mR):
        # 2 selects per layer (shared by all 9 taps) instead of a mask per tap.
        return jnp.where(mL, a, 0.0), a, jnp.where(mR, a, 0.0)

    def build_stack(act, mL, mR, cin):
        """Write the 9 shifted tap planes of `act` (cin, hw) into stack_ref[0:9*cin]."""
        aL, a0, aR = variants(act, mL, mR)
        for t, (oy, ox) in enumerate(taps):
            src = aL if ox < 0 else (aR if ox > 0 else a0)
            stack_ref[t * cin:(t + 1) * cin, :] = _shift_cols(src, oy * W + ox)

    def matmul_bias_relu(w, b_full, cin):
        # Cin->Cout x 9-tap contraction on the MXU; f32 operands + HIGHEST precision keep
        # the multi-pass f32 matmul (no bf16 truncation) so we match the f32 reference.
        y = jnp.dot(w, stack_ref[0:9 * cin, :],
                    preferred_element_type=f32,
                    precision=lax.Precision.HIGHEST)
        return jnp.maximum(y + b_full, 0.0)

    # Layer-1 tap planes for the whole sublane-stacked image batch of this grid step.
    x_all = x_ref[0].astype(f32)                                   # (nb, hw)
    xL, x0, xR = variants(x_all, mL_n, mR_n)
    l1_planes = []
    for (oy, ox) in taps:
        src = xL if ox < 0 else (xR if ox > 0 else x0)
        l1_planes.append(_shift_cols(src, oy * W + ox))            # (nb, hw) each

    for n in range(nb):
        # ---- layer 1 (cin = 1): stack rows 0..8 are image n's precomputed tap planes.
        for t in range(9):
            stack_ref[t:t + 1, :] = l1_planes[t][n:n + 1, :]
        act = matmul_bias_relu(w0, b0, 1)                          # (cout, hw)
        # ---- layer 2
        build_stack(act, mL_c, mR_c, cout)
        act = matmul_bias_relu(w1, b1, cout)
        # ---- layer 3
        build_stack(act, mL_c, mR_c, cout)
        act = matmul_bias_relu(w2, b2, cout)
        o_ref[0, n] = act.astype(o_ref.dtype)                      # lane-dense store


def pixel_feat_forward(x_nchw, params, cout):
    """x_nchw: (N, 1, H, W) -> (N, cout, H, W), all f32."""
    N, cin0, H, W = x_nchw.shape
    assert cin0 == 1, "PixelFeatModule expects a single input channel"
    hw = H * W
    P = 9 + 18 * cout + 3
    assert params.shape == (cout, P), params.shape

    # Fatten grid steps (amortize per-step pipeline/DMA overhead on single-TC v5e/v6e)
    # while keeping >= 2 steps when possible so both v7x TensorCores stay busy.
    steps = 2 if N >= 2 else 1
    nb = -(-N // steps)                    # images per grid step
    Np = nb * steps

    x_flat = x_nchw.reshape(N, hw).astype(jnp.float32)
    if Np != N:
        x_flat = jnp.pad(x_flat, ((0, Np - N), (0, 0)))
    x_blk = x_flat.reshape(steps, nb, hw)  # channel-major, lane-dense; free reshapes

    out = pl.pallas_call(
        functools.partial(_fused_kernel, H=H, W=W, cout=cout, nb=nb),
        out_shape=jax.ShapeDtypeStruct((steps, nb, cout, hw), jnp.float32),
        grid=(steps,),
        in_specs=[
            pl.BlockSpec((1, nb, hw), lambda i: (i, 0, 0)),        # nb images per step
            pl.BlockSpec((cout, P), lambda i: (0, 0)),             # fused weight/bias slab
        ],
        out_specs=pl.BlockSpec((1, nb, cout, hw), lambda i: (i, 0, 0, 0)),
        scratch_shapes=[pltpu.VMEM((9 * cout, hw), jnp.float32)],  # im2col tap stack
        compiler_params=pltpu.CompilerParams(
            dimension_semantics=("parallel",)),                    # batch across v7x's 2 TCs
    )(x_blk, params)

    return out.reshape(Np, cout, hw)[:N].reshape(N, cout, H, W)


def init_conv_params(key, cin, cout, kh=3, kw=3):
    """Deterministic init mimicking PyTorch Conv2d defaults (uniform +/- 1/sqrt(fan_in)).
    Canonical storage is HWIO (kh, kw, cin, cout) so the lax.conv reference can use it."""
    w_key, b_key = jax.random.split(key)
    fan_in = cin * kh * kw
    bound = 1.0 / jnp.sqrt(fan_in)
    w = jax.random.uniform(w_key, (kh, kw, cin, cout), jnp.float32, -bound, bound)
    b = jax.random.uniform(b_key, (cout,), jnp.float32, -bound, bound)
    return w, b


def pack_params(w0, b0, w1, b1, w2, b2):
    """Pack all conv weights/biases into one (cout, 9 + 9*cout + 9*cout + 3) slab.
    Weight column k = (ky*3 + kx)*cin + ci, matching the in-kernel tap-stack row order."""
    cout = w0.shape[-1]

    def pack_w(w):  # HWIO (3,3,cin,cout) -> (cout, 9*cin)
        kh, kw, cin, co = w.shape
        return jnp.transpose(w, (3, 0, 1, 2)).reshape(co, kh * kw * cin)

    return jnp.concatenate(
        [pack_w(w0), pack_w(w1), pack_w(w2),
         b0.reshape(cout, 1), b1.reshape(cout, 1), b2.reshape(cout, 1)], axis=1)


class PixelFeatModulePallas:
    """Three conv3x3+ReLU layers (1->oc, oc->oc, oc->oc) fused into one Pallas kernel."""

    def __init__(self, out_channels=8, key=jax.random.PRNGKey(0)):
        k0, k1, k2 = jax.random.split(key, 3)
        self.out_channels = out_channels
        self.w0, self.b0 = init_conv_params(k0, 1, out_channels)
        self.w1, self.b1 = init_conv_params(k1, out_channels, out_channels)
        self.w2, self.b2 = init_conv_params(k2, out_channels, out_channels)
        self.params = pack_params(self.w0, self.b0, self.w1, self.b1, self.w2, self.b2)

    @functools.partial(jax.jit, static_argnums=0)
    def __call__(self, x_nchw):
        return pixel_feat_forward(x_nchw, self.params, self.out_channels)


def reference_forward(x_nchw, module):
    """Pure-JAX reference (lax.conv_general_dilated, NCHW) for correctness."""
    def conv(x, w, b):
        y = lax.conv_general_dilated(
            x, w, window_strides=(1, 1), padding="SAME",
            dimension_numbers=("NCHW", "HWIO", "NCHW"),
            precision=lax.Precision.HIGHEST)
        return jnp.maximum(y + b[None, :, None, None], 0.0)

    x = x_nchw.astype(jnp.float32)
    x = conv(x, module.w0, module.b0)
    x = conv(x, module.w1, module.b1)
    x = conv(x, module.w2, module.b2)
    return x


if __name__ == "__main__":
    key = jax.random.PRNGKey(0)
    x_key, x2_key, p_key = jax.random.split(key, 3)

    module = PixelFeatModulePallas(out_channels=8, key=p_key)

    # Small NCHW input consistent with Conv2d(in_channels=1, ...): (2, 1, 16, 16).
    x = jax.random.normal(x_key, (2, 1, 16, 16), jnp.float32)
    out = jax.block_until_ready(module(x))
    ref = jax.block_until_ready(reference_forward(x, module))
    assert out.shape == (2, 8, 16, 16), out.shape
    err = float(jnp.max(jnp.abs(out - ref)))
    assert jnp.allclose(out, ref, atol=5e-5, rtol=5e-5), err

    # Also exercise the multi-image-per-step (Nb>1) and batch-padding path.
    x2 = jax.random.normal(x2_key, (5, 1, 16, 16), jnp.float32)
    out2 = jax.block_until_ready(module(x2))
    ref2 = jax.block_until_ready(reference_forward(x2, module))
    assert out2.shape == (5, 8, 16, 16), out2.shape
    err2 = float(jnp.max(jnp.abs(out2 - ref2)))
    assert jnp.allclose(out2, ref2, atol=5e-5, rtol=5e-5), err2

    print("KERNEL_OK")
</pallas_src>

<mosaic_0001>
module attributes {stable_mosaic.version = 11 : i64} {
  func.func @_fused_kernel(%arg0: i32, %arg1: memref<1x1x256xf32, #tpu.memory_space<vmem>>, %arg2: memref<8x156xf32, #tpu.memory_space<vmem>>, %arg3: memref<1x1x8x256xf32, #tpu.memory_space<vmem>>, %arg4: memref<72x256xf32, #tpu.memory_space<vmem>>) attributes {dimension_semantics = [#tpu.dimension_semantics<parallel>], iteration_bounds = array<i64: 2>, scalar_prefetch = 0 : i64, scratch_operands = 1 : i64, tpu.core_type = #tpu.core_type<tc>, window_params = [{transform_indices = @transform_0, window_bounds = array<i64: 1, 1, 256>}, {pipeline_mode = #tpu.pipeline_mode<synchronous>, transform_indices = @transform_1, window_bounds = array<i64: 8, 156>}, {transform_indices = @transform_2, window_bounds = array<i64: 1, 1, 8, 256>}]} {
    %0 = tpu.iota {dimensions = array<i32: 1>} : vector<8x256xi32>
    %c16_i32 = arith.constant 16 : i32
    %c0_i32 = arith.constant 0 : i32
    %1 = arith.cmpi eq, %c16_i32, %c0_i32 : i32
    %c1_i32 = arith.constant 1 : i32
    %2 = arith.select %1, %c1_i32, %c16_i32 : i32
    %3 = vector.broadcast %2 : i32 to vector<8x256xi32>
    %4 = arith.remsi %0, %3 : vector<8x256xi32>
    %c0_i32_0 = arith.constant 0 : i32
    %5 = vector.broadcast %c0_i32_0 : i32 to vector<8x256xi32>
    %6 = arith.cmpi ne, %4, %5 : vector<8x256xi32>
    %c0_i32_1 = arith.constant 0 : i32
    %7 = vector.broadcast %c0_i32_1 : i32 to vector<8x256xi32>
    %8 = arith.cmpi slt, %4, %7 : vector<8x256xi32>
    %c0_i32_2 = arith.constant 0 : i32
    %9 = arith.cmpi slt, %2, %c0_i32_2 : i32
    %10 = vector.broadcast %9 : i1 to vector<8x256xi1>
    %11 = vector.broadcast %10 : vector<8x256xi1> to vector<8x256xi1>
    %12 = arith.xori %8, %11 : vector<8x256xi1>
    %13 = arith.andi %12, %6 : vector<8x256xi1>
    %14 = vector.broadcast %2 : i32 to vector<8x256xi32>
    %15 = arith.addi %4, %14 : vector<8x256xi32>
    %16 = arith.select %13, %15, %4 : vector<8x256xi1>, vector<8x256xi32>
    %c15_i32 = arith.constant 15 : i32
    %17 = vector.broadcast %c15_i32 : i32 to vector<8x256xi32>
    %18 = arith.cmpi ne, %16, %17 : vector<8x256xi32>
    %c0_i32_3 = arith.constant 0 : i32
    %19 = vector.broadcast %c0_i32_3 : i32 to vector<8x256xi32>
    %20 = arith.cmpi ne, %16, %19 : vector<8x256xi32>
    %21 = tpu.iota {dimensions = array<i32: 1>} : vector<1x256xi32>
    %c16_i32_4 = arith.constant 16 : i32
    %c0_i32_5 = arith.constant 0 : i32
    %22 = arith.cmpi eq, %c16_i32_4, %c0_i32_5 : i32
    %c1_i32_6 = arith.constant 1 : i32
    %23 = arith.select %22, %c1_i32_6, %c16_i32_4 : i32
    %24 = vector.broadcast %23 : i32 to vector<1x256xi32>
    %25 = arith.remsi %21, %24 : vector<1x256xi32>
    %c0_i32_7 = arith.constant 0 : i32
    %26 = vector.broadcast %c0_i32_7 : i32 to vector<1x256xi32>
    %27 = arith.cmpi ne, %25, %26 : vector<1x256xi32>
    %c0_i32_8 = arith.constant 0 : i32
    %28 = vector.broadcast %c0_i32_8 : i32 to vector<1x256xi32>
    %29 = arith.cmpi slt, %25, %28 : vector<1x256xi32>
    %c0_i32_9 = arith.constant 0 : i32
    %30 = arith.cmpi slt, %23, %c0_i32_9 : i32
    %31 = vector.broadcast %30 : i1 to vector<1x256xi1>
    %32 = vector.broadcast %31 : vector<1x256xi1> to vector<1x256xi1>
    %33 = arith.xori %29, %32 : vector<1x256xi1>
    %34 = arith.andi %33, %27 : vector<1x256xi1>
    %35 = vector.broadcast %23 : i32 to vector<1x256xi32>
    %36 = arith.addi %25, %35 : vector<1x256xi32>
    %37 = arith.select %34, %36, %25 : vector<1x256xi1>, vector<1x256xi32>
    %c15_i32_10 = arith.constant 15 : i32
    %38 = vector.broadcast %c15_i32_10 : i32 to vector<1x256xi32>
    %39 = arith.cmpi ne, %37, %38 : vector<1x256xi32>
    %c0_i32_11 = arith.constant 0 : i32
    %40 = vector.broadcast %c0_i32_11 : i32 to vector<1x256xi32>
    %41 = arith.cmpi ne, %37, %40 : vector<1x256xi32>
    %c0 = arith.constant 0 : index
    %c0_12 = arith.constant 0 : index
    %42 = vector.load %arg2[%c0, %c0_12] : memref<8x156xf32, #tpu.memory_space<vmem>>, vector<8x9xf32>
    %c0_13 = arith.constant 0 : index
    %c9 = arith.constant 9 : index
    %43 = vector.load %arg2[%c0_13, %c9] : memref<8x156xf32, #tpu.memory_space<vmem>>, vector<8x72xf32>
    %c0_14 = arith.constant 0 : index
    %c81 = arith.constant 81 : index
    %44 = vector.load %arg2[%c0_14, %c81] : memref<8x156xf32, #tpu.memory_space<vmem>>, vector<8x72xf32>
    %c0_15 = arith.constant 0 : index
    %c153 = arith.constant 153 : index
    %45 = vector.load %arg2[%c0_15, %c153] : memref<8x156xf32, #tpu.memory_space<vmem>>, vector<8x1xf32>
    %46 = vector.shape_cast %45 : vector<8x1xf32> to vector<8x1xf32>
    %47 = vector.broadcast %46 : vector<8x1xf32> to vector<8x256xf32>
    %c0_16 = arith.constant 0 : index
    %c154 = arith.constant 154 : index
    %48 = vector.load %arg2[%c0_16, %c154] : memref<8x156xf32, #tpu.memory_space<vmem>>, vector<8x1xf32>
    %49 = vector.shape_cast %48 : vector<8x1xf32> to vector<8x1xf32>
    %50 = vector.broadcast %49 : vector<8x1xf32> to vector<8x256xf32>
    %c0_17 = arith.constant 0 : index
    %c155 = arith.constant 155 : index
    %51 = vector.load %arg2[%c0_17, %c155] : memref<8x156xf32, #tpu.memory_space<vmem>>, vector<8x1xf32>
    %52 = vector.shape_cast %51 : vector<8x1xf32> to vector<8x1xf32>
    %53 = vector.broadcast %52 : vector<8x1xf32> to vector<8x256xf32>
    %c0_18 = arith.constant 0 : index
    %c0_19 = arith.constant 0 : index
    %c0_20 = arith.constant 0 : index
    %54 = vector.load %arg1[%c0_18, %c0_19, %c0_20] : memref<1x1x256xf32, #tpu.memory_space<vmem>>, vector<1x1x256xf32>
    %55 = vector.shape_cast %54 : vector<1x1x256xf32> to vector<1x256xf32>
    %cst = arith.constant 0.000000e+00 : f32
    %56 = vector.broadcast %cst : f32 to vector<1x256xf32>
    %57 = arith.select %39, %55, %56 : vector<1x256xi1>, vector<1x256xf32>
    %cst_21 = arith.constant 0.000000e+00 : f32
    %58 = vector.broadcast %cst_21 : f32 to vector<1x256xf32>
    %59 = arith.select %41, %55, %58 : vector<1x256xi1>, vector<1x256xf32>
    %cst_22 = arith.constant 0.000000e+00 : f32
    %60 = vector.broadcast %cst_22 : f32 to vector<1x17xf32>
    %61 = vector.extract_strided_slice %57 {offsets = [0, 0], sizes = [1, 239], strides = [1, 1]} : vector<1x256xf32> to vector<1x239xf32>
    %62 = tpu.concatenate %60, %61 in 1 : vector<1x17xf32>, vector<1x239xf32> -> vector<1x256xf32>
    %cst_23 = arith.constant 0.000000e+00 : f32
    %63 = vector.broadcast %cst_23 : f32 to vector<1x16xf32>
    %64 = vector.extract_strided_slice %55 {offsets = [0, 0], sizes = [1, 240], strides = [1, 1]} : vector<1x256xf32> to vector<1x240xf32>
    %65 = tpu.concatenate %63, %64 in 1 : vector<1x16xf32>, vector<1x240xf32> -> vector<1x256xf32>
    %cst_24 = arith.constant 0.000000e+00 : f32
    %66 = vector.broadcast %cst_24 : f32 to vector<1x15xf32>
    %67 = vector.extract_strided_slice %59 {offsets = [0, 0], sizes = [1, 241], strides = [1, 1]} : vector<1x256xf32> to vector<1x241xf32>
    %68 = tpu.concatenate %66, %67 in 1 : vector<1x15xf32>, vector<1x241xf32> -> vector<1x256xf32>
    %cst_25 = arith.constant 0.000000e+00 : f32
    %69 = vector.broadcast %cst_25 : f32 to vector<1x1xf32>
    %70 = vector.extract_strided_slice %57 {offsets = [0, 0], sizes = [1, 255], strides = [1, 1]} : vector<1x256xf32> to vector<1x255xf32>
    %71 = tpu.concatenate %69, %70 in 1 : vector<1x1xf32>, vector<1x255xf32> -> vector<1x256xf32>
    %cst_26 = arith.constant 0.000000e+00 : f32
    %72 = vector.broadcast %cst_26 : f32 to vector<1x1xf32>
    %73 = vector.extract_strided_slice %59 {offsets = [0, 1], sizes = [1, 255], strides = [1, 1]} : vector<1x256xf32> to vector<1x255xf32>
    %74 = tpu.concatenate %73, %72 in 1 : vector<1x255xf32>, vector<1x1xf32> -> vector<1x256xf32>
    %cst_27 = arith.constant 0.000000e+00 : f32
    %75 = vector.broadcast %cst_27 : f32 to vector<1x15xf32>
    %76 = vector.extract_strided_slice %57 {offsets = [0, 15], sizes = [1, 241], strides = [1, 1]} : vector<1x256xf32> to vector<1x241xf32>
    %77 = tpu.concatenate %76, %75 in 1 : vector<1x241xf32>, vector<1x15xf32> -> vector<1x256xf32>
    %cst_28 = arith.constant 0.000000e+00 : f32
    %78 = vector.broadcast %cst_28 : f32 to vector<1x16xf32>
    %79 = vector.extract_strided_slice %55 {offsets = [0, 16], sizes = [1, 240], strides = [1, 1]} : vector<1x256xf32> to vector<1x240xf32>
    %80 = tpu.concatenate %79, %78 in 1 : vector<1x240xf32>, vector<1x16xf32> -> vector<1x256xf32>
    %cst_29 = arith.constant 0.000000e+00 : f32
    %81 = vector.broadcast %cst_29 : f32 to vector<1x17xf32>
    %82 = vector.extract_strided_slice %59 {offsets = [0, 17], sizes = [1, 239], strides = [1, 1]} : vector<1x256xf32> to vector<1x239xf32>
    %83 = tpu.concatenate %82, %81 in 1 : vector<1x239xf32>, vector<1x17xf32> -> vector<1x256xf32>
    %c0_30 = arith.constant 0 : index
    %c0_31 = arith.constant 0 : index
    %84 = vector.load %arg4[%c0_30, %c0_31] : memref<72x256xf32, #tpu.memory_space<vmem>>, vector<1x256xf32>
    tpu.vector_store %arg4[%c0_30, %c0_31], %62 {strides = array<i32>} : memref<72x256xf32, #tpu.memory_space<vmem>>, vector<1x256xf32>,
    %c1 = arith.constant 1 : index
    %c0_32 = arith.constant 0 : index
    %85 = vector.load %arg4[%c1, %c0_32] : memref<72x256xf32, #tpu.memory_space<vmem>>, vector<1x256xf32>
    tpu.vector_store %arg4[%c1, %c0_32], %65 {strides = array<i32>} : memref<72x256xf32, #tpu.memory_space<vmem>>, vector<1x256xf32>,
    %c2 = arith.constant 2 : index
    %c0_33 = arith.constant 0 : index
    %86 = vector.load %arg4[%c2, %c0_33] : memref<72x256xf32, #tpu.memory_space<vmem>>, vector<1x256xf32>
    tpu.vector_store %arg4[%c2, %c0_33], %68 {strides = array<i32>} : memref<72x256xf32, #tpu.memory_space<vmem>>, vector<1x256xf32>,
    %c3 = arith.constant 3 : index
    %c0_34 = arith.constant 0 : index
    %87 = vector.load %arg4[%c3, %c0_34] : memref<72x256xf32, #tpu.memory_space<vmem>>, vector<1x256xf32>
    tpu.vector_store %arg4[%c3, %c0_34], %71 {strides = array<i32>} : memref<72x256xf32, #tpu.memory_space<vmem>>, vector<1x256xf32>,
    %c4 = arith.constant 4 : index
    %c0_35 = arith.constant 0 : index
    %88 = vector.load %arg4[%c4, %c0_35] : memref<72x256xf32, #tpu.memory_space<vmem>>, vector<1x256xf32>
    tpu.vector_store %arg4[%c4, %c0_35], %55 {strides = array<i32>} : memref<72x256xf32, #tpu.memory_space<vmem>>, vector<1x256xf32>,
    %c5 = arith.constant 5 : index
    %c0_36 = arith.constant 0 : index
    %89 = vector.load %arg4[%c5, %c0_36] : memref<72x256xf32, #tpu.memory_space<vmem>>, vector<1x256xf32>
    tpu.vector_store %arg4[%c5, %c0_36], %74 {strides = array<i32>} : memref<72x256xf32, #tpu.memory_space<vmem>>, vector<1x256xf32>,
    %c6 = arith.constant 6 : index
    %c0_37 = arith.constant 0 : index
    %90 = vector.load %arg4[%c6, %c0_37] : memref<72x256xf32, #tpu.memory_space<vmem>>, vector<1x256xf32>
    tpu.vector_store %arg4[%c6, %c0_37], %77 {strides = array<i32>} : memref<72x256xf32, #tpu.memory_space<vmem>>, vector<1x256xf32>,
    %c7 = arith.constant 7 : index
    %c0_38 = arith.constant 0 : index
    %91 = vector.load %arg4[%c7, %c0_38] : memref<72x256xf32, #tpu.memory_space<vmem>>, vector<1x256xf32>
    tpu.vector_store %arg4[%c7, %c0_38], %80 {strides = array<i32>} : memref<72x256xf32, #tpu.memory_space<vmem>>, vector<1x256xf32>,
    %c8 = arith.constant 8 : index
    %c0_39 = arith.constant 0 : index
    %92 = vector.load %arg4[%c8, %c0_39] : memref<72x256xf32, #tpu.memory_space<vmem>>, vector<1x256xf32>
    tpu.vector_store %arg4[%c8, %c0_39], %83 {strides = array<i32>} : memref<72x256xf32, #tpu.memory_space<vmem>>, vector<1x256xf32>,
    %c0_40 = arith.constant 0 : index
    %c0_41 = arith.constant 0 : index
    %93 = vector.load %arg4[%c0_40, %c0_41] : memref<72x256xf32, #tpu.memory_space<vmem>>, vector<9x256xf32>
    %cst_42 = arith.constant dense<0.000000e+00> : vector<8x256xf32>
    %94 = tpu.matmul %42, %93, %cst_42 {dimension_numbers = #tpu.dot_dimension_numbers<[1], [0], [0], [1], [0, 0, 1, 1], [], []>, precision = #tpu.contract_precision<fp32>} : vector<8x9xf32>, vector<9x256xf32>, vector<8x256xf32> -> vector<8x256xf32>
    %95 = arith.addf %94, %47 : vector<8x256xf32>
    %cst_43 = arith.constant 0.000000e+00 : f32
    %96 = vector.broadcast %cst_43 : f32 to vector<8x256xf32>
    %97 = arith.maximumf %95, %96 : vector<8x256xf32>
    %cst_44 = arith.constant 0.000000e+00 : f32
    %98 = vector.broadcast %cst_44 : f32 to vector<8x256xf32>
    %99 = arith.select %18, %97, %98 : vector<8x256xi1>, vector<8x256xf32>
    %cst_45 = arith.constant 0.000000e+00 : f32
    %100 = vector.broadcast %cst_45 : f32 to vector<8x256xf32>
    %101 = arith.select %20, %97, %100 : vector<8x256xi1>, vector<8x256xf32>
    %cst_46 = arith.constant 0.000000e+00 : f32
    %102 = vector.broadcast %cst_46 : f32 to vector<8x17xf32>
    %103 = vector.extract_strided_slice %99 {offsets = [0, 0], sizes = [8, 239], strides = [1, 1]} : vector<8x256xf32> to vector<8x239xf32>
    %104 = tpu.concatenate %102, %103 in 1 : vector<8x17xf32>, vector<8x239xf32> -> vector<8x256xf32>
    %c0_47 = arith.constant 0 : index
    %c0_48 = arith.constant 0 : index
    %105 = vector.load %arg4[%c0_47, %c0_48] : memref<72x256xf32, #tpu.memory_space<vmem>>, vector<8x256xf32>
    tpu.vector_store %arg4[%c0_47, %c0_48], %104 {strides = array<i32>} : memref<72x256xf32, #tpu.memory_space<vmem>>, vector<8x256xf32>,
    %cst_49 = arith.constant 0.000000e+00 : f32
    %106 = vector.broadcast %cst_49 : f32 to vector<8x16xf32>
    %107 = vector.extract_strided_slice %97 {offsets = [0, 0], sizes = [8, 240], strides = [1, 1]} : vector<8x256xf32> to vector<8x240xf32>
    %108 = tpu.concatenate %106, %107 in 1 : vector<8x16xf32>, vector<8x240xf32> -> vector<8x256xf32>
    %c8_50 = arith.constant 8 : index
    %c0_51 = arith.constant 0 : index
    %109 = vector.load %arg4[%c8_50, %c0_51] : memref<72x256xf32, #tpu.memory_space<vmem>>, vector<8x256xf32>
    tpu.vector_store %arg4[%c8_50, %c0_51], %108 {strides = array<i32>} : memref<72x256xf32, #tpu.memory_space<vmem>>, vector<8x256xf32>,
    %cst_52 = arith.constant 0.000000e+00 : f32
    %110 = vector.broadcast %cst_52 : f32 to vector<8x15xf32>
    %111 = vector.extract_strided_slice %101 {offsets = [0, 0], sizes = [8, 241], strides = [1, 1]} : vector<8x256xf32> to vector<8x241xf32>
    %112 = tpu.concatenate %110, %111 in 1 : vector<8x15xf32>, vector<8x241xf32> -> vector<8x256xf32>
    %c16 = arith.constant 16 : index
    %c0_53 = arith.constant 0 : index
    %113 = vector.load %arg4[%c16, %c0_53] : memref<72x256xf32, #tpu.memory_space<vmem>>, vector<8x256xf32>
    tpu.vector_store %arg4[%c16, %c0_53], %112 {strides = array<i32>} : memref<72x256xf32, #tpu.memory_space<vmem>>, vector<8x256xf32>,
    %cst_54 = arith.constant 0.000000e+00 : f32
    %114 = vector.broadcast %cst_54 : f32 to vector<8x1xf32>
    %115 = vector.extract_strided_slice %99 {offsets = [0, 0], sizes = [8, 255], strides = [1, 1]} : vector<8x256xf32> to vector<8x255xf32>
    %116 = tpu.concatenate %114, %115 in 1 : vector<8x1xf32>, vector<8x255xf32> -> vector<8x256xf32>
    %c24 = arith.constant 24 : index
    %c0_55 = arith.constant 0 : index
    %117 = vector.load %arg4[%c24, %c0_55] : memref<72x256xf32, #tpu.memory_space<vmem>>, vector<8x256xf32>
    tpu.vector_store %arg4[%c24, %c0_55], %116 {strides = array<i32>} : memref<72x256xf32, #tpu.memory_space<vmem>>, vector<8x256xf32>,
    %c32 = arith.constant 32 : index
    %c0_56 = arith.constant 0 : index
    %118 = vector.load %arg4[%c32, %c0_56] : memref<72x256xf32, #tpu.memory_space<vmem>>, vector<8x256xf32>
    tpu.vector_store %arg4[%c32, %c0_56], %97 {strides = array<i32>} : memref<72x256xf32, #tpu.memory_space<vmem>>, vector<8x256xf32>,
    %cst_57 = arith.constant 0.000000e+00 : f32
    %119 = vector.broadcast %cst_57 : f32 to vector<8x1xf32>
    %120 = vector.extract_strided_slice %101 {offsets = [0, 1], sizes = [8, 255], strides = [1, 1]} : vector<8x256xf32> to vector<8x255xf32>
    %121 = tpu.concatenate %120, %119 in 1 : vector<8x255xf32>, vector<8x1xf32> -> vector<8x256xf32>
    %c40 = arith.constant 40 : index
    %c0_58 = arith.constant 0 : index
    %122 = vector.load %arg4[%c40, %c0_58] : memref<72x256xf32, #tpu.memory_space<vmem>>, vector<8x256xf32>
    tpu.vector_store %arg4[%c40, %c0_58], %121 {strides = array<i32>} : memref<72x256xf32, #tpu.memory_space<vmem>>, vector<8x256xf32>,
    %cst_59 = arith.constant 0.000000e+00 : f32
    %123 = vector.broadcast %cst_59 : f32 to vector<8x15xf32>
    %124 = vector.extract_strided_slice %99 {offsets = [0, 15], sizes = [8, 241], strides = [1, 1]} : vector<8x256xf32> to vector<8x241xf32>
    %125 = tpu.concatenate %124, %123 in 1 : vector<8x241xf32>, vector<8x15xf32> -> vector<8x256xf32>
    %c48 = arith.constant 48 : index
    %c0_60 = arith.constant 0 : index
    %126 = vector.load %arg4[%c48, %c0_60] : memref<72x256xf32, #tpu.memory_space<vmem>>, vector<8x256xf32>
    tpu.vector_store %arg4[%c48, %c0_60], %125 {strides = array<i32>} : memref<72x256xf32, #tpu.memory_space<vmem>>, vector<8x256xf32>,
    %cst_61 = arith.constant 0.000000e+00 : f32
    %127 = vector.broadcast %cst_61 : f32 to vector<8x16xf32>
    %128 = vector.extract_strided_slice %97 {offsets = [0, 16], sizes = [8, 240], strides = [1, 1]} : vector<8x256xf32> to vector<8x240xf32>
    %129 = tpu.concatenate %128, %127 in 1 : vector<8x240xf32>, vector<8x16xf32> -> vector<8x256xf32>
    %c56 = arith.constant 56 : index
    %c0_62 = arith.constant 0 : index
    %130 = vector.load %arg4[%c56, %c0_62] : memref<72x256xf32, #tpu.memory_space<vmem>>, vector<8x256xf32>
    tpu.vector_store %arg4[%c56, %c0_62], %129 {strides = array<i32>} : memref<72x256xf32, #tpu.memory_space<vmem>>, vector<8x256xf32>,
    %cst_63 = arith.constant 0.000000e+00 : f32
    %131 = vector.broadcast %cst_63 : f32 to vector<8x17xf32>
    %132 = vector.extract_strided_slice %101 {offsets = [0, 17], sizes = [8, 239], strides = [1, 1]} : vector<8x256xf32> to vector<8x239xf32>
    %133 = tpu.concatenate %132, %131 in 1 : vector<8x239xf32>, vector<8x17xf32> -> vector<8x256xf32>
    %c64 = arith.constant 64 : index
    %c0_64 = arith.constant 0 : index
    %134 = vector.load %arg4[%c64, %c0_64] : memref<72x256xf32, #tpu.memory_space<vmem>>, vector<8x256xf32>
    tpu.vector_store %arg4[%c64, %c0_64], %133 {strides = array<i32>} : memref<72x256xf32, #tpu.memory_space<vmem>>, vector<8x256xf32>,
    %c0_65 = arith.constant 0 : index
    %c0_66 = arith.constant 0 : index
    %135 = vector.load %arg4[%c0_65, %c0_66] : memref<72x256xf32, #tpu.memory_space<vmem>>, vector<72x256xf32>
    %cst_67 = arith.constant dense<0.000000e+00> : vector<8x256xf32>
    %136 = tpu.matmul %43, %135, %cst_67 {dimension_numbers = #tpu.dot_dimension_numbers<[1], [0], [0], [1], [0, 0, 1, 1], [], []>, precision = #tpu.contract_precision<fp32>} : vector<8x72xf32>, vector<72x256xf32>, vector<8x256xf32> -> vector<8x256xf32>
    %137 = arith.addf %136, %50 : vector<8x256xf32>
    %cst_68 = arith.constant 0.000000e+00 : f32
    %138 = vector.broadcast %cst_68 : f32 to vector<8x256xf32>
    %139 = arith.maximumf %137, %138 : vector<8x256xf32>
    %cst_69 = arith.constant 0.000000e+00 : f32
    %140 = vector.broadcast %cst_69 : f32 to vector<8x256xf32>
    %141 = arith.select %18, %139, %140 : vector<8x256xi1>, vector<8x256xf32>
    %cst_70 = arith.constant 0.000000e+00 : f32
    %142 = vector.broadcast %cst_70 : f32 to vector<8x256xf32>
    %143 = arith.select %20, %139, %142 : vector<8x256xi1>, vector<8x256xf32>
    %cst_71 = arith.constant 0.000000e+00 : f32
    %144 = vector.broadcast %cst_71 : f32 to vector<8x17xf32>
    %145 = vector.extract_strided_slice %141 {offsets = [0, 0], sizes = [8, 239], strides = [1, 1]} : vector<8x256xf32> to vector<8x239xf32>
    %146 = tpu.concatenate %144, %145 in 1 : vector<8x17xf32>, vector<8x239xf32> -> vector<8x256xf32>
    %c0_72 = arith.constant 0 : index
    %c0_73 = arith.constant 0 : index
    %147 = vector.load %arg4[%c0_72, %c0_73] : memref<72x256xf32, #tpu.memory_space<vmem>>, vector<8x256xf32>
    tpu.vector_store %arg4[%c0_72, %c0_73], %146 {strides = array<i32>} : memref<72x256xf32, #tpu.memory_space<vmem>>, vector<8x256xf32>,
    %cst_74 = arith.constant 0.000000e+00 : f32
    %148 = vector.broadcast %cst_74 : f32 to vector<8x16xf32>
    %149 = vector.extract_strided_slice %139 {offsets = [0, 0], sizes = [8, 240], strides = [1, 1]} : vector<8x256xf32> to vector<8x240xf32>
    %150 = tpu.concatenate %148, %149 in 1 : vector<8x16xf32>, vector<8x240xf32> -> vector<8x256xf32>
    %c8_75 = arith.constant 8 : index
    %c0_76 = arith.constant 0 : index
    %151 = vector.load %arg4[%c8_75, %c0_76] : memref<72x256xf32, #tpu.memory_space<vmem>>, vector<8x256xf32>
    tpu.vector_store %arg4[%c8_75, %c0_76], %150 {strides = array<i32>} : memref<72x256xf32, #tpu.memory_space<vmem>>, vector<8x256xf32>,
    %cst_77 = arith.constant 0.000000e+00 : f32
    %152 = vector.broadcast %cst_77 : f32 to vector<8x15xf32>
    %153 = vector.extract_strided_slice %143 {offsets = [0, 0], sizes = [8, 241], strides = [1, 1]} : vector<8x256xf32> to vector<8x241xf32>
    %154 = tpu.concatenate %152, %153 in 1 : vector<8x15xf32>, vector<8x241xf32> -> vector<8x256xf32>
    %c16_78 = arith.constant 16 : index
    %c0_79 = arith.constant 0 : index
    %155 = vector.load %arg4[%c16_78, %c0_79] : memref<72x256xf32, #tpu.memory_space<vmem>>, vector<8x256xf32>
    tpu.vector_store %arg4[%c16_78, %c0_79], %154 {strides = array<i32>} : memref<72x256xf32, #tpu.memory_space<vmem>>, vector<8x256xf32>,
    %cst_80 = arith.constant 0.000000e+00 : f32
    %156 = vector.broadcast %cst_80 : f32 to vector<8x1xf32>
    %157 = vector.extract_strided_slice %141 {offsets = [0, 0], sizes = [8, 255], strides = [1, 1]} : vector<8x256xf32> to vector<8x255xf32>
    %158 = tpu.concatenate %156, %157 in 1 : vector<8x1xf32>, vector<8x255xf32> -> vector<8x256xf32>
    %c24_81 = arith.constant 24 : index
    %c0_82 = arith.constant 0 : index
    %159 = vector.load %arg4[%c24_81, %c0_82] : memref<72x256xf32, #tpu.memory_space<vmem>>, vector<8x256xf32>
    tpu.vector_store %arg4[%c24_81, %c0_82], %158 {strides = array<i32>} : memref<72x256xf32, #tpu.memory_space<vmem>>, vector<8x256xf32>,
    %c32_83 = arith.constant 32 : index
    %c0_84 = arith.constant 0 : index
    %160 = vector.load %arg4[%c32_83, %c0_84] : memref<72x256xf32, #tpu.memory_space<vmem>>, vector<8x256xf32>
    tpu.vector_store %arg4[%c32_83, %c0_84], %139 {strides = array<i32>} : memref<72x256xf32, #tpu.memory_space<vmem>>, vector<8x256xf32>,
    %cst_85 = arith.constant 0.000000e+00 : f32
    %161 = vector.broadcast %cst_85 : f32 to vector<8x1xf32>
    %162 = vector.extract_strided_slice %143 {offsets = [0, 1], sizes = [8, 255], strides = [1, 1]} : vector<8x256xf32> to vector<8x255xf32>
    %163 = tpu.concatenate %162, %161 in 1 : vector<8x255xf32>, vector<8x1xf32> -> vector<8x256xf32>
    %c40_86 = arith.constant 40 : index
    %c0_87 = arith.constant 0 : index
    %164 = vector.load %arg4[%c40_86, %c0_87] : memref<72x256xf32, #tpu.memory_space<vmem>>, vector<8x256xf32>
    tpu.vector_store %arg4[%c40_86, %c0_87], %163 {strides = array<i32>} : memref<72x256xf32, #tpu.memory_space<vmem>>, vector<8x256xf32>,
    %cst_88 = arith.constant 0.000000e+00 : f32
    %165 = vector.broadcast %cst_88 : f32 to vector<8x15xf32>
    %166 = vector.extract_strided_slice %141 {offsets = [0, 15], sizes = [8, 241], strides = [1, 1]} : vector<8x256xf32> to vector<8x241xf32>
    %167 = tpu.concatenate %166, %165 in 1 : vector<8x241xf32>, vector<8x15xf32> -> vector<8x256xf32>
    %c48_89 = arith.constant 48 : index
    %c0_90 = arith.constant 0 : index
    %168 = vector.load %arg4[%c48_89, %c0_90] : memref<72x256xf32, #tpu.memory_space<vmem>>, vector<8x256xf32>
    tpu.vector_store %arg4[%c48_89, %c0_90], %167 {strides = array<i32>} : memref<72x256xf32, #tpu.memory_space<vmem>>, vector<8x256xf32>,
    %cst_91 = arith.constant 0.000000e+00 : f32
    %169 = vector.broadcast %cst_91 : f32 to vector<8x16xf32>
    %170 = vector.extract_strided_slice %139 {offsets = [0, 16], sizes = [8, 240], strides = [1, 1]} : vector<8x256xf32> to vector<8x240xf32>
    %171 = tpu.concatenate %170, %169 in 1 : vector<8x240xf32>, vector<8x16xf32> -> vector<8x256xf32>
    %c56_92 = arith.constant 56 : index
    %c0_93 = arith.constant 0 : index
    %172 = vector.load %arg4[%c56_92, %c0_93] : memref<72x256xf32, #tpu.memory_space<vmem>>, vector<8x256xf32>
    tpu.vector_store %arg4[%c56_92, %c0_93], %171 {strides = array<i32>} : memref<72x256xf32, #tpu.memory_space<vmem>>, vector<8x256xf32>,
    %cst_94 = arith.constant 0.000000e+00 : f32
    %173 = vector.broadcast %cst_94 : f32 to vector<8x17xf32>
    %174 = vector.extract_strided_slice %143 {offsets = [0, 17], sizes = [8, 239], strides = [1, 1]} : vector<8x256xf32> to vector<8x239xf32>
    %175 = tpu.concatenate %174, %173 in 1 : vector<8x239xf32>, vector<8x17xf32> -> vector<8x256xf32>
    %c64_95 = arith.constant 64 : index
    %c0_96 = arith.constant 0 : index
    %176 = vector.load %arg4[%c64_95, %c0_96] : memref<72x256xf32, #tpu.memory_space<vmem>>, vector<8x256xf32>
    tpu.vector_store %arg4[%c64_95, %c0_96], %175 {strides = array<i32>} : memref<72x256xf32, #tpu.memory_space<vmem>>, vector<8x256xf32>,
    %c0_97 = arith.constant 0 : index
    %c0_98 = arith.constant 0 : index
    %177 = vector.load %arg4[%c0_97, %c0_98] : memref<72x256xf32, #tpu.memory_space<vmem>>, vector<72x256xf32>
    %cst_99 = arith.constant dense<0.000000e+00> : vector<8x256xf32>
    %178 = tpu.matmul %44, %177, %cst_99 {dimension_numbers = #tpu.dot_dimension_numbers<[1], [0], [0], [1], [0, 0, 1, 1], [], []>, precision = #tpu.contract_precision<fp32>} : vector<8x72xf32>, vector<72x256xf32>, vector<8x256xf32> -> vector<8x256xf32>
    %179 = arith.addf %178, %53 : vector<8x256xf32>
    %cst_100 = arith.constant 0.000000e+00 : f32
    %180 = vector.broadcast %cst_100 : f32 to vector<8x256xf32>
    %181 = arith.maximumf %179, %180 : vector<8x256xf32>
    %c0_101 = arith.constant 0 : index
    %c0_102 = arith.constant 0 : index
    %c0_103 = arith.constant 0 : index
    %c0_104 = arith.constant 0 : index
    %182 = vector.load %arg3[%c0_101, %c0_102, %c0_103, %c0_104] : memref<1x1x8x256xf32, #tpu.memory_space<vmem>>, vector<1x1x8x256xf32>
    %183 = vector.shape_cast %182 : vector<1x1x8x256xf32> to vector<8x256xf32>
    %184 = vector.shape_cast %181 : vector<8x256xf32> to vector<1x1x8x256xf32>
    tpu.vector_store %arg3[%c0_101, %c0_102, %c0_103, %c0_104], %184 {strides = array<i32>} : memref<1x1x8x256xf32, #tpu.memory_space<vmem>>, vector<1x1x8x256xf32>,
    return
  }
  func.func @transform_0(%arg0: i32) -> (i32, i32, i32) {
    %c0_i32 = arith.constant 0 : i32
    %c0_i32_0 = arith.constant 0 : i32
    %c0_i32_1 = arith.constant 0 : i32
    return %arg0, %c0_i32, %c0_i32_0 : i32, i32, i32
  }
  func.func @transform_1(%arg0: i32) -> (i32, i32) {
    %c0_i32 = arith.constant 0 : i32
    %c0_i32_0 = arith.constant 0 : i32
    %c0_i32_1 = arith.constant 0 : i32
    return %c0_i32, %c0_i32_0 : i32, i32
  }
  func.func @transform_2(%arg0: i32) -> (i32, i32, i32, i32) {
    %c0_i32 = arith.constant 0 : i32
    %c0_i32_0 = arith.constant 0 : i32
    %c0_i32_1 = arith.constant 0 : i32
    %c0_i32_2 = arith.constant 0 : i32
    return %arg0, %c0_i32, %c0_i32_0, %c0_i32_1 : i32, i32, i32, i32
  }
}

</mosaic_0001>

<llo_original>
// kernel: a_call__.1
$region0: #{a_call__.1}
  #allocation0 [shape = 'u32[]', space=smem, size = 0x4, offset = 0x4, fixed_abs, tag = 'smem constant byte address 0x4 - core index']
  #allocation1 [shape = 'u32[144,128]{1,0:T(1,128)}', space=vmem, size = 0x12000, scoped, tag = 'internal scratch']
  #allocation2 [shape = 'f32[72,256]{1,0:T(8,128)}', space=vmem, size = 0x12000, scoped, tag = 'scratch operand']
  %s0 = inlined_call_operand.vmem [shape: f32[2,1,256], index: 0, kind: input, shape index: {}]
  %s1 = inlined_call_operand.vmem [shape: f32[8,156], index: 1, kind: input, shape index: {}]
  %s2 = inlined_call_operand.vmem [shape: f32[2,1,8,256], index: 2, kind: output, shape index: {}]
  %s3 = sld [smem:[#allocation0]]
  $region41: #{a_call__.1} parent=0
    _
  %s5 = ssub.s32 1, %s3
  %s6 = scalar_select 0, %s5, %s3
  loop: start=0, step=1, limit=4
  $region2: #{a_call__.1} parent=0 // loop_pre_header
    _
  $region3: #{a_call__.1} parent=0 // loop_header
    %s8 = sphi 0, %s12
    %p9 = scmp.ge.s32.totalorder %s8, 4
    %s18 = sphi 0, %s20
    %s21 = sphi 0, %s18
    %s22 = sphi 0, %s21
    %s38 = sphi 0, %s22
    %s42 = sphi 0, %s42
    %s44 = sphi 0, %s42
    %s45 = sphi 0, %s44
    %s59 = sphi 0, %s45
    %s65 = sphi 0, %s67
    %s68 = sphi 0, %s65
    %s69 = sphi 0, %s68
    %s85 = sphi 0, %s69
  $region4: #{a_call__.1} parent=0 // loop_header_branch
    %11 = sbr.rel (%p9) target = $region8
  $region5: #{a_call__.1} parent=0 // loop_body
    %s13 = ssub.s32 %s8, 1
    %s14 = ssub.s32 %s8, 2
    %s15 = sadd.s32 %s8, 1
    %s16 = ssub.s32 %s8, %s15
    %p17 = scmp.eq.s32.totalorder %s16, 0
    %s19 = sadd.s32 %s18, 1
    %s20 = scalar_select %p17, %s18, %s19
    %p23 = pneg %p17
    %p24 = scmp.eq.s32.totalorder %s8, 1
    %p25 = por %p23, %p24
    %p26 = scmp.ne.s32.totalorder %s18, %s21
    %p27 = scmp.eq.s32.totalorder %s8, 0
    %p28 = por %p26, %p27
    %p29 = scmp.ne.s32.totalorder %s18, %s21
    %p30 = scmp.eq.s32.totalorder %s13, 1
    %p31 = por %p29, %p30
    %p32 = scmp.ne.s32.totalorder %s21, %s22
    %p33 = scmp.eq.s32.totalorder %s13, 0
    %p34 = por %p32, %p33
    %p35 = scmp.ne.s32.totalorder %s21, %s22
    %p36 = scmp.eq.s32.totalorder %s14, 1
    %p37 = por %p35, %p36
    %p39 = scmp.ne.s32.totalorder %s22, %s38
    %p40 = scmp.eq.s32.totalorder %s14, 0
    %p41 = por %p39, %p40
    %s43 = sadd.s32 %s42, 1
    %p46 = scmp.eq.s32.totalorder %s8, 1
    %p47 = scmp.ne.s32.totalorder %s42, %s44
    %p48 = scmp.eq.s32.totalorder %s8, 0
    %p49 = por %p47, %p48
    %p50 = scmp.ne.s32.totalorder %s42, %s44
    %p51 = scmp.eq.s32.totalorder %s13, 1
    %p52 = por %p50, %p51
    %p53 = scmp.ne.s32.totalorder %s44, %s45
    %p54 = scmp.eq.s32.totalorder %s13, 0
    %p55 = por %p53, %p54
    %p56 = scmp.ne.s32.totalorder %s44, %s45
    %p57 = scmp.eq.s32.totalorder %s14, 1
    %p58 = por %p56, %p57
    %p60 = scmp.ne.s32.totalorder %s45, %s59
    %p61 = scmp.eq.s32.totalorder %s14, 0
    %p62 = por %p60, %p61
    %s63 = ssub.s32 %s8, %s15
    %p64 = scmp.eq.s32.totalorder %s63, 0
    %s66 = sadd.s32 %s65, 1
    %s67 = scalar_select %p64, %s65, %s66
    %p70 = pneg %p64
    %p71 = scmp.eq.s32.totalorder %s8, 1
    %p72 = por %p70, %p71
    %p73 = scmp.ne.s32.totalorder %s65, %s68
    %p74 = scmp.eq.s32.totalorder %s8, 0
    %p75 = por %p73, %p74
    %p76 = scmp.ne.s32.totalorder %s65, %s68
    %p77 = scmp.eq.s32.totalorder %s13, 1
    %p78 = por %p76, %p77
    %p79 = scmp.ne.s32.totalorder %s68, %s69
    %p80 = scmp.eq.s32.totalorder %s13, 0
    %p81 = por %p79, %p80
    %p82 = scmp.ne.s32.totalorder %s68, %s69
    %p83 = scmp.eq.s32.totalorder %s14, 1
    %p84 = por %p82, %p83
    %p86 = scmp.ne.s32.totalorder %s69, %s85
    %p87 = scmp.eq.s32.totalorder %s14, 0
    %p88 = por %p86, %p87
    %p89 = scmp.le.s32.totalorder 1, %s8
    %p90 = scmp.lt.s32.totalorder %s8, 3
    %p91 = pnand %p89, %p90
    %p92 = pneg %p91
    // Predicated region
    $region9: #{a_call__.1} parent=5 // pred_check
      _
    $region10: #{a_call__.1} parent=5 // pred_check_branch
      %94 = sbr.rel (%p91) target = $region12
    $region11: #{a_call__.1} parent=5 // pred_region
      %s95 = ssub.s32 %s8, 1
      // Predicated region
      $region13: #{a_call__.1} parent=11 // pred_check
        %p96 = pneg %p55
      $region14: #{a_call__.1} parent=11 // pred_check_branch
        %98 = sbr.rel (%p96) target = $region16
      $region15: #{a_call__.1} parent=11 // pred_region
        _
      $region16: #{a_call__.1} parent=11 // pred_fallthru
        _
    $region12: #{a_call__.1} parent=5 // pred_fallthru
      _
    %p99 = scmp.lt.s32.totalorder %s8, 2
    // Predicated region
    $region17: #{a_call__.1} parent=5 // pred_check
      %p100 = pneg %p99
    $region18: #{a_call__.1} parent=5 // pred_check_branch
      %102 = sbr.rel (%p100) target = $region20
    $region19: #{a_call__.1} parent=5 // pred_region
      // Predicated region
      $region21: #{a_call__.1} parent=19 // pred_check
        %p103 = pneg %p28
      $region22: #{a_call__.1} parent=19 // pred_check_branch
        %105 = sbr.rel (%p103) target = $region24
      $region23: #{a_call__.1} parent=19 // pred_region
        %p106 = scmp.lt.s32.totalorder %s8, 1
        %s107 = scalar_select %p106, %s8, 1
        %s108 = smul.addr %s107, 2
        %s109 = scalar_lea.vmem %s0, %s108
      $region24: #{a_call__.1} parent=19 // pred_fallthru
        _
    $region20: #{a_call__.1} parent=5 // pred_fallthru
      _
    %p110 = scmp.le.s32.totalorder 1, %s8
    %p111 = scmp.lt.s32.totalorder %s8, 3
    %p112 = pnand %p110, %p111
    %p113 = pneg %p112
    // Predicated region
    $region25: #{a_call__.1} parent=5 // pred_check
      _
    $region26: #{a_call__.1} parent=5 // pred_check_branch
      %115 = sbr.rel (%p112) target = $region28
    $region27: #{a_call__.1} parent=5 // pred_region
      %s116 = ssub.s32 %s8, 1
      %p117 = scmp.lt.s32.totalorder %s13, 1
      %s118 = scalar_select %p117, %s13, 1
      %s119 = smul.addr %s118, 2
      %s120 = scalar_lea.vmem %s0, %s119
      %p121 = pneg %p34
      %p122 = pneg %p31
      %p123 = pneg %p55
      %p124 = pneg %p52
      %p125 = pneg %p81
      %p126 = pneg %p78
      %p127 = scmp.lt.s32.totalorder %s13, 1
      %s128 = scalar_select %p127, %s13, 1
      %s129 = smul.addr %s128, 2
      %s130 = smul.addr %s129, 8
      %s131 = scalar_lea.vmem %s2, %s130
      %p132 = scmp.lt.s32.totalorder %s13, 1
      %s133 = scalar_select %p132, %s13, 1
      %s134 = smul.addr %s133, 2
      %s135 = scalar_lea.vmem %s0, %s134
      %p136 = scmp.lt.s32.totalorder %s13, 1
      %s137 = scalar_select %p136, %s13, 1
      %s138 = smul.addr %s137, 2
      %s139 = smul.addr %s138, 8
      %s140 = scalar_lea.vmem %s2, %s139
      %v141 = vlaneseq
      %v142 = vand.u32 %v141, 127
      %v143 = vadd.s32 %v142, 128
      %vm144 = vcmp.lt.s32.totalorder %v142, 0
      %v145 = vsub.s32 0, %v142
      %v146 = vsel %vm144, %v145, %v142
      %v147 = vshrl.u32 %v146, 4
      %v148 = vand.u32 %v146, 15
      %v149 = vsub.s32 0, %v148
      %v150 = vsel %vm144, %v149, %v148
      %vm151 = vcmp.lt.s32.totalorder %v143, 0
      %v152 = vsub.s32 0, %v143
      %v153 = vsel %vm151, %v152, %v143
      %v154 = vshrl.u32 %v153, 4
      %v155 = vand.u32 %v153, 15
      %v156 = vsub.s32 0, %v155
      %v157 = vsel %vm151, %v156, %v155
      %vm158 = vcmp.ne.s32.totalorder %v150, 0
      %vm159 = vcmp.ne.s32.totalorder %v157, 0
      %vm160 = vcmp.lt.s32.totalorder %v150, 0
      %vm161 = vcmp.lt.s32.totalorder %v157, 0
      %vm162 = vmand %vm160, %vm158
      %vm163 = vmand %vm161, %vm159
      %v164 = vadd.s32 %v150, 16
      %v165 = vadd.s32 %v157, 16
      %v166 = vsel %vm162, %v164, %v150
      %v167 = vsel %vm163, %v165, %v157
      %vm168 = vcmp.ne.s32.totalorder %v166, 15
      %vm169 = vcmp.ne.s32.totalorder %v167, 15
      %vm170 = vcmp.ne.s32.totalorder %v166, 0
      %vm171 = vcmp.ne.s32.totalorder %v167, 0
      %v172 = vld [vmem:[%s1] sm:$0xff]
      %v173 = vld [vmem:[%s1 + $0x8] sm:$0xff]
      %175 = vset.pattern.permute.xlu0 25
      %176 = vperm.xlu0 %175, %v173
      %v177 = vpop.permute.xlu0 %176
      %179 = vset.pattern.permute.xlu0 26
      %180 = vperm.xlu0 %179, %v173
      %v181 = vpop.permute.xlu0 %180
      %183 = vset.pattern.permute.xlu0 27
      %184 = vperm.xlu0 %183, %v173
      %v185 = vpop.permute.xlu0 %184
      %v187 = vld [vmem:[%s135] sm:$0x3]
      %v189 = vlaneseq
      %v190 = vshrl.u32 %v189, 7
      %v191 = vsub.s32 0, %v190
      %v192 = vrot.slane %v187, %v191
      %v193 = vlaneseq
      %v194 = vshrl.u32 %v193, 7
      %v195 = vsub.s32 1, %v194
      %v196 = vrot.slane %v187, %v195
      %v199 = vsel %vm168, %v192, 0.0
      %v200 = vsel %vm169, %v196, 0.0
      %v201 = vsel %vm170, %v192, 0.0
      %v202 = vsel %vm171, %v196, 0.0
      %205 = vrot.lane.b32.xlu0 %v199, 17
      %v206 = vpop.permute.xlu0 %205
      %207 = vrot.lane.b32.xlu0 %v200, 17
      %v208 = vpop.permute.xlu0 %207
      %vm209 = vcmask 138240
      %v210 = vsel %vm209, %v206, %v208
      %v212 = vsel %vm209, 0.0, %v206
      %213 = vrot.lane.b32.xlu0 %v192, 16
      %v214 = vpop.permute.xlu0 %213
      %215 = vrot.lane.b32.xlu0 %v196, 16
      %v216 = vpop.permute.xlu0 %215
      %vm217 = vcmask 130048
      %v218 = vsel %vm217, %v214, %v216
      %v220 = vsel %vm217, 0.0, %v214
      %223 = vrot.lane.b32.xlu0 %v201, 15
      %v224 = vpop.permute.xlu0 %223
      %225 = vrot.lane.b32.xlu0 %v202, 15
      %v226 = vpop.permute.xlu0 %225
      %vm227 = vcmask 121856
      %v228 = vsel %vm227, %v224, %v226
      %v230 = vsel %vm227, 0.0, %v224
      %231 = vrot.lane.b32.xlu0 %v199, 1
      %v232 = vpop.permute.xlu0 %231
      %233 = vrot.lane.b32.xlu0 %v200, 1
      %v234 = vpop.permute.xlu0 %233
      %vm235 = vcmask 7168
      %v236 = vsel %vm235, %v232, %v234
      %v238 = vsel %vm235, 0.0, %v232
      %239 = vrot.lane.b32.xlu0 %v201, 127
      %v240 = vpop.permute.xlu0 %239
      %241 = vrot.lane.b32.xlu0 %v202, 127
      %v242 = vpop.permute.xlu0 %241
      %vm243 = vcmask 1039360
      %v244 = vsel %vm243, %v240, %v242
      %v246 = vsel %vm243, %v242, 0.0
      %247 = vrot.lane.b32.xlu0 %v199, 113
      %v248 = vpop.permute.xlu0 %247
      %249 = vrot.lane.b32.xlu0 %v200, 113
      %v250 = vpop.permute.xlu0 %249
      %vm251 = vcmask 924672
      %v252 = vsel %vm251, %v248, %v250
      %v254 = vsel %vm251, %v250, 0.0
      %255 = vrot.lane.b32.xlu0 %v192, 112
      %v256 = vpop.permute.xlu0 %255
      %257 = vrot.lane.b32.xlu0 %v196, 112
      %v258 = vpop.permute.xlu0 %257
      %vm259 = vcmask 916480
      %v260 = vsel %vm259, %v256, %v258
      %v262 = vsel %vm259, %v258, 0.0
      %263 = vrot.lane.b32.xlu0 %v201, 111
      %v264 = vpop.permute.xlu0 %263
      %265 = vrot.lane.b32.xlu0 %v202, 111
      %v266 = vpop.permute.xlu0 %265
      %vm267 = vcmask 908288
      %v268 = vsel %vm267, %v264, %v266
      %v270 = vsel %vm267, %v266, 0.0
      %v272 = vcombine.low %v212, %v210
      %v274 = vunpack.c.l.s4 1966171168
      %v275 = vunpack.c.0.s8 %v274
      %v276 = vlaneseq
      %v277 = vshrl.u32 %v276, 7
      %v278 = vsub.s32 %v275, %v277
      %v279 = vrot.slane %v272, %v278
      %v281 = vunpack.c.l.s4 1966171168
      %v282 = vunpack.c.0.s8 %v281
      %v283 = vlaneseq
      %v284 = vshrl.u32 %v283, 7
      %v285 = vsub.s32 %v282, %v284
      %v286 = vrot.slane %v279, %v285
      %v288 = vlaneseq
      %vm289 = vcmp.ge.s32.totalorder %v288, 0
      %vm290 = vcmp.lt.s32.totalorder %v288, 256
      %vm291 = vmand %vm289, %vm290
      %292 = vst.msk [vmem:[#allocation2] ss:$8 sm:$0x3] %vm291, %v286
      %293 = vst.msk [vmem:[#allocation2] ss:$8 sm:$0x0] %vm291, %v286
      %v295 = vcombine.low %v220, %v218
      %v297 = vunpack.c.l.s4 1966171168
      %v298 = vunpack.c.0.s8 %v297
      %v299 = vlaneseq
      %v300 = vshrl.u32 %v299, 7
      %v301 = vsub.s32 %v298, %v300
      %v302 = vrot.slane %v295, %v301
      %v304 = vunpack.c.l.s4 1966171168
      %v305 = vunpack.c.0.s8 %v304
      %v306 = vlaneseq
      %v307 = vshrl.u32 %v306, 7
      %v308 = vsub.s32 %v305, %v307
      %v309 = vrot.slane %v302, %v308
      %s311 = scalar_lea.vmem [#allocation2], 1
      %312 = vst.msk [vmem:[%s311] ss:$8 sm:$0x3] %vm291, %v309
      %313 = vst.msk [vmem:[%s311] ss:$8 sm:$0x0] %vm291, %v309
      %v315 = vcombine.low %v230, %v228
      %v317 = vunpack.c.l.s4 1966171168
      %v318 = vunpack.c.0.s8 %v317
      %v319 = vlaneseq
      %v320 = vshrl.u32 %v319, 7
      %v321 = vsub.s32 %v318, %v320
      %v322 = vrot.slane %v315, %v321
      %v324 = vunpack.c.l.s4 1966171168
      %v325 = vunpack.c.0.s8 %v324
      %v326 = vlaneseq
      %v327 = vshrl.u32 %v326, 7
      %v328 = vsub.s32 %v325, %v327
      %v329 = vrot.slane %v322, %v328
      %s331 = scalar_lea.vmem [#allocation2], 2
      %332 = vst.msk [vmem:[%s331] ss:$8 sm:$0x3] %vm291, %v329
      %333 = vst.msk [vmem:[%s331] ss:$8 sm:$0x0] %vm291, %v329
      %v335 = vcombine.low %v238, %v236
      %v337 = vunpack.c.l.s4 1966171168
      %v338 = vunpack.c.0.s8 %v337
      %v339 = vlaneseq
      %v340 = vshrl.u32 %v339, 7
      %v341 = vsub.s32 %v338, %v340
      %v342 = vrot.slane %v335, %v341
      %v344 = vunpack.c.l.s4 1966171168
      %v345 = vunpack.c.0.s8 %v344
      %v346 = vlaneseq
      %v347 = vshrl.u32 %v346, 7
      %v348 = vsub.s32 %v345, %v347
      %v349 = vrot.slane %v342, %v348
      %s351 = scalar_lea.vmem [#allocation2], 3
      %352 = vst.msk [vmem:[%s351] ss:$8 sm:$0x3] %vm291, %v349
      %353 = vst.msk [vmem:[%s351] ss:$8 sm:$0x0] %vm291, %v349
      %s354 = scalar_lea.vmem [#allocation2], 4
      %355 = vst.msk [vmem:[%s354] ss:$8 sm:$0x3] %vm291, %v187
      %356 = vst.msk [vmem:[%s354] ss:$8 sm:$0x0] %vm291, %v187
      %v358 = vcombine.low %v244, %v246
      %v360 = vunpack.c.l.s4 1966171168
      %v361 = vunpack.c.0.s8 %v360
      %v362 = vlaneseq
      %v363 = vshrl.u32 %v362, 7
      %v364 = vsub.s32 %v361, %v363
      %v365 = vrot.slane %v358, %v364
      %v367 = vunpack.c.l.s4 1966171168
      %v368 = vunpack.c.0.s8 %v367
      %v369 = vlaneseq
      %v370 = vshrl.u32 %v369, 7
      %v371 = vsub.s32 %v368, %v370
      %v372 = vrot.slane %v365, %v371
      %s374 = scalar_lea.vmem [#allocation2], 5
      %375 = vst.msk [vmem:[%s374] ss:$8 sm:$0x3] %vm291, %v372
      %376 = vst.msk [vmem:[%s374] ss:$8 sm:$0x0] %vm291, %v372
      %v378 = vcombine.low %v252, %v254
      %v380 = vunpack.c.l.s4 1966171168
      %v381 = vunpack.c.0.s8 %v380
      %v382 = vlaneseq
      %v383 = vshrl.u32 %v382, 7
      %v384 = vsub.s32 %v381, %v383
      %v385 = vrot.slane %v378, %v384
      %v387 = vunpack.c.l.s4 1966171168
      %v388 = vunpack.c.0.s8 %v387
      %v389 = vlaneseq
      %v390 = vshrl.u32 %v389, 7
      %v391 = vsub.s32 %v388, %v390
      %v392 = vrot.slane %v385, %v391
      %s394 = scalar_lea.vmem [#allocation2], 6
      %395 = vst.msk [vmem:[%s394] ss:$8 sm:$0x3] %vm291, %v392
      %396 = vst.msk [vmem:[%s394] ss:$8 sm:$0x0] %vm291, %v392
      %v398 = vcombine.low %v260, %v262
      %v400 = vunpack.c.l.s4 1966171168
      %v401 = vunpack.c.0.s8 %v400
      %v402 = vlaneseq
      %v403 = vshrl.u32 %v402, 7
      %v404 = vsub.s32 %v401, %v403
      %v405 = vrot.slane %v398, %v404
      %v407 = vunpack.c.l.s4 1966171168
      %v408 = vunpack.c.0.s8 %v407
      %v409 = vlaneseq
      %v410 = vshrl.u32 %v409, 7
      %v411 = vsub.s32 %v408, %v410
      %v412 = vrot.slane %v405, %v411
      %s414 = scalar_lea.vmem [#allocation2], 7
      %415 = vst.msk [vmem:[%s414] ss:$8 sm:$0x3] %vm291, %v412
      %416 = vst.msk [vmem:[%s414] ss:$8 sm:$0x0] %vm291, %v412
      %v418 = vcombine.low %v268, %v270
      %v420 = vunpack.c.l.s4 1966171168
      %v421 = vunpack.c.0.s8 %v420
      %v422 = vlaneseq
      %v423 = vshrl.u32 %v422, 7
      %v424 = vsub.s32 %v421, %v423
      %v425 = vrot.slane %v418, %v424
      %v427 = vunpack.c.l.s4 1966171168
      %v428 = vunpack.c.0.s8 %v427
      %v429 = vlaneseq
      %v430 = vshrl.u32 %v429, 7
      %v431 = vsub.s32 %v428, %v430
      %v432 = vrot.slane %v425, %v431
      %s434 = scalar_lea.vmem [#allocation2], 16
      %435 = vst.msk [vmem:[%s434] ss:$8 sm:$0x3] %vm291, %v432
      %436 = vst.msk [vmem:[%s434] ss:$8 sm:$0x0] %vm291, %v432
      %v437 = vld [vmem:[#allocation2] sm:$0xff]
      %v438 = vld [vmem:[#allocation2 + $0x8] sm:$0xff]
      %v439 = vld [vmem:[#allocation2 + $0x10] sm:$0x1]
      %v440 = vld [vmem:[#allocation2 + $0x18] sm:$0x1]
      %vm441 = vcmask 72704
      %v443 = vsel %vm441, %v172, 0
      %vm445 = vcmask 1040384
      %v447 = vsel %vm445, %v439, 0
      %v450 = vsel %vm445, %v440, 0
      %v452 = vand.u32 %v438, 4294901760
      %453 = vmatprep.subr.mxu0 %v452
      %v454 = vand.u32 %v437, 4294901760
      %455 = vmatpush1.msra.mxu0 %v454
      %v456 = vand.u32 %v450, 4294901760
      %457 = vmatprep.subr.mxu0 %v456
      %v458 = vand.u32 %v447, 4294901760
      %459 = vmatpush1.msra.mxu0 %v458
      %460 = vmatprep.subr.mxu0 0.0
      %461 = vmatpush1.msra.mxu0 0.0
      %462 = vmatprep.subr.mxu0 0.0
      %463 = vmatpush1.msra.mxu0 0.0
      %464 = vmatprep.subr.mxu0 0.0
      %465 = vmatpush1.msra.mxu0 0.0
      %466 = vmatprep.subr.mxu0 0.0
      %467 = vmatpush1.msra.mxu0 0.0
      %468 = vmatprep.subr.mxu0 0.0
      %469 = vmatpush1.msra.mxu0 0.0
      %470 = vmatprep.subr.mxu0 0.0
      %471 = vmatpush1.msra.mxu0 0.0
      %472 = vmatprep.subr.mxu0 0.0
      %473 = vmatpush1.msra.mxu0 0.0
      %474 = vmatprep.subr.mxu0 0.0
      %475 = vmatpush1.msra.mxu0 0.0
      %476 = vmatprep.subr.mxu0 0.0
      %477 = vmatpush1.msra.mxu0 0.0
      %478 = vmatprep.subr.mxu0 0.0
      %479 = vmatpush1.msra.mxu0 0.0
      %480 = vmatprep.subr.mxu0 0.0
      %481 = vmatpush1.msra.mxu0 0.0
      %482 = vmatprep.subr.mxu0 0.0
      %483 = vmatpush1.msra.mxu0 0.0
      %484 = vmatprep.subr.mxu0 0.0
      %485 = vmatpush1.msra.mxu0 0.0
      %486 = vmatprep.subr.mxu0 0.0
      %487 = vmatpush1.msra.mxu0 0.0
      %488 = vmatprep.subr.mxu0 0.0
      %489 = vmatpush1.msra.mxu0 0.0
      %490 = vmatprep.subr.mxu0 0.0
      %491 = vmatpush1.msra.mxu0 0.0
      %492 = vmatprep.subr.mxu0 0.0
      %493 = vmatpush1.msra.mxu0 0.0
      %494 = vmatprep.subr.mxu0 0.0
      %495 = vmatpush1.msra.mxu0 0.0
      %496 = vmatprep.subr.mxu0 0.0
      %497 = vmatpush1.msra.mxu0 0.0
      %498 = vmatprep.subr.mxu0 0.0
      %499 = vmatpush1.msra.mxu0 0.0
      %500 = vmatprep.subr.mxu0 0.0
      %501 = vmatpush1.msra.mxu0 0.0
      %502 = vmatprep.subr.mxu0 0.0
      %503 = vmatpush1.msra.mxu0 0.0
      %504 = vmatprep.subr.mxu0 0.0
      %505 = vmatpush1.msra.mxu0 0.0
      %506 = vmatprep.subr.mxu0 0.0
      %507 = vmatpush1.msra.mxu0 0.0
      %508 = vmatprep.subr.mxu0 0.0
      %509 = vmatpush1.msra.mxu0 0.0
      %510 = vmatprep.subr.mxu0 0.0
      %511 = vmatpush1.msra.mxu0 0.0
      %512 = vmatprep.subr.mxu0 0.0
      %513 = vmatpush1.msra.mxu0 0.0
      %514 = vmatprep.subr.mxu0 0.0
      %515 = vmatpush1.msra.mxu0 0.0
      %516 = vmatprep.subr.mxu0 0.0
      %517 = vmatpush1.msra.mxu0 0.0
      %518 = vmatprep.subr.mxu0 0.0
      %519 = vmatpush1.msra.mxu0 0.0
      %520 = vmatprep.mubr.f32.mxu0 0.0
      %v521 = vand.u32 %v443, 4294901760
      %v522 = vsub.f32 %v443, %v521
      %v523 = vand.u32 %v522, 4294901760
      %v524 = vsub.f32 %v522, %v523
      %v525 = vand.u32 %v524, 4294901760
      %526 = vmatmul.mubr.f32.gmra.mrb[0].mxu0 %v525
      %v527 = vpop.f32.mrb[0].mxu0
      %v528 = vadd.f32 %v177, %v527
      %v529 = vpop.f32.mrb[0].mxu0
      %v530 = vadd.f32 %v177, %v529
      %531 = vdwg.mxu0
      %v532 = vand.u32 %v438, 4294901760
      %v533 = vsub.f32 %v438, %v532
      %v534 = vand.u32 %v533, 4294901760
      %v535 = vsub.f32 %v533, %v534
      %v536 = vand.u32 %v535, 4294901760
      %537 = vmatprep.subr.mxu0 %v536
      %v538 = vand.u32 %v437, 4294901760
      %v539 = vsub.f32 %v437, %v538
      %v540 = vand.u32 %v539, 4294901760
      %v541 = vsub.f32 %v539, %v540
      %v542 = vand.u32 %v541, 4294901760
      %543 = vmatpush1.msra.mxu0 %v542
      %v544 = vand.u32 %v450, 4294901760
      %v545 = vsub.f32 %v450, %v544
      %v546 = vand.u32 %v545, 4294901760
      %v547 = vsub.f32 %v545, %v546
      %v548 = vand.u32 %v547, 4294901760
      %549 = vmatprep.subr.mxu0 %v548
      %v550 = vand.u32 %v447, 4294901760
      %v551 = vsub.f32 %v447, %v550
      %v552 = vand.u32 %v551, 4294901760
      %v553 = vsub.f32 %v551, %v552
      %v554 = vand.u32 %v553, 4294901760
      %555 = vmatpush1.msra.mxu0 %v554
      %556 = vmatprep.subr.mxu0 0.0
      %557 = vmatpush1.msra.mxu0 0.0
      %558 = vmatprep.subr.mxu0 0.0
      %559 = vmatpush1.msra.mxu0 0.0
      %560 = vmatprep.subr.mxu0 0.0
      %561 = vmatpush1.msra.mxu0 0.0
      %562 = vmatprep.subr.mxu0 0.0
      %563 = vmatpush1.msra.mxu0 0.0
      %564 = vmatprep.subr.mxu0 0.0
      %565 = vmatpush1.msra.mxu0 0.0
      %566 = vmatprep.subr.mxu0 0.0
      %567 = vmatpush1.msra.mxu0 0.0
      %568 = vmatprep.subr.mxu0 0.0
      %569 = vmatpush1.msra.mxu0 0.0
      %570 = vmatprep.subr.mxu0 0.0
      %571 = vmatpush1.msra.mxu0 0.0
      %572 = vmatprep.subr.mxu0 0.0
      %573 = vmatpush1.msra.mxu0 0.0
      %574 = vmatprep.subr.mxu0 0.0
      %575 = vmatpush1.msra.mxu0 0.0
      %576 = vmatprep.subr.mxu0 0.0
      %577 = vmatpush1.msra.mxu0 0.0
      %578 = vmatprep.subr.mxu0 0.0
      %579 = vmatpush1.msra.mxu0 0.0
      %580 = vmatprep.subr.mxu0 0.0
      %581 = vmatpush1.msra.mxu0 0.0
      %582 = vmatprep.subr.mxu0 0.0
      %583 = vmatpush1.msra.mxu0 0.0
      %584 = vmatprep.subr.mxu0 0.0
      %585 = vmatpush1.msra.mxu0 0.0
      %586 = vmatprep.subr.mxu0 0.0
      %587 = vmatpush1.msra.mxu0 0.0
      %588 = vmatprep.subr.mxu0 0.0
      %589 = vmatpush1.msra.mxu0 0.0
      %590 = vmatprep.subr.mxu0 0.0
      %591 = vmatpush1.msra.mxu0 0.0
      %592 = vmatprep.subr.mxu0 0.0
      %593 = vmatpush1.msra.mxu0 0.0
      %594 = vmatprep.subr.mxu0 0.0
      %595 = vmatpush1.msra.mxu0 0.0
      %596 = vmatprep.subr.mxu0 0.0
      %597 = vmatpush1.msra.mxu0 0.0
      %598 = vmatprep.subr.mxu0 0.0
      %599 = vmatpush1.msra.mxu0 0.0
      %600 = vmatprep.subr.mxu0 0.0
      %601 = vmatpush1.msra.mxu0 0.0
      %602 = vmatprep.subr.mxu0 0.0
      %603 = vmatpush1.msra.mxu0 0.0
      %604 = vmatprep.subr.mxu0 0.0
      %605 = vmatpush1.msra.mxu0 0.0
      %606 = vmatprep.subr.mxu0 0.0
      %607 = vmatpush1.msra.mxu0 0.0
      %608 = vmatprep.subr.mxu0 0.0
      %609 = vmatpush1.msra.mxu0 0.0
      %610 = vmatprep.subr.mxu0 0.0
      %611 = vmatpush1.msra.mxu0 0.0
      %612 = vmatprep.subr.mxu0 0.0
      %613 = vmatpush1.msra.mxu0 0.0
      %614 = vmatprep.subr.mxu0 0.0
      %615 = vmatpush1.msra.mxu0 0.0
      %616 = vmatprep.mubr.f32.mxu0 0.0
      %v617 = vand.u32 %v443, 4294901760
      %618 = vmatmul.mubr.f32.gmra.mrb[0].mxu0 %v617
      %v619 = vpop.f32.mrb[0].mxu0
      %v620 = vadd.f32 %v528, %v619
      %v621 = vpop.f32.mrb[0].mxu0
      %v622 = vadd.f32 %v530, %v621
      %623 = vdwg.mxu0
      %v624 = vand.u32 %v438, 4294901760
      %v625 = vsub.f32 %v438, %v624
      %626 = vmatprep.subr.mxu0 %v625
      %v627 = vand.u32 %v437, 4294901760
      %v628 = vsub.f32 %v437, %v627
      %629 = vmatpush1.msra.mxu0 %v628
      %v630 = vand.u32 %v450, 4294901760
      %v631 = vsub.f32 %v450, %v630
      %632 = vmatprep.subr.mxu0 %v631
      %v633 = vand.u32 %v447, 4294901760
      %v634 = vsub.f32 %v447, %v633
      %635 = vmatpush1.msra.mxu0 %v634
      %636 = vmatprep.subr.mxu0 0.0
      %637 = vmatpush1.msra.mxu0 0.0
      %638 = vmatprep.subr.mxu0 0.0
      %639 = vmatpush1.msra.mxu0 0.0
      %640 = vmatprep.subr.mxu0 0.0
      %641 = vmatpush1.msra.mxu0 0.0
      %642 = vmatprep.subr.mxu0 0.0
      %643 = vmatpush1.msra.mxu0 0.0
      %644 = vmatprep.subr.mxu0 0.0
      %645 = vmatpush1.msra.mxu0 0.0
      %646 = vmatprep.subr.mxu0 0.0
      %647 = vmatpush1.msra.mxu0 0.0
      %648 = vmatprep.subr.mxu0 0.0
      %649 = vmatpush1.msra.mxu0 0.0
      %650 = vmatprep.subr.mxu0 0.0
      %651 = vmatpush1.msra.mxu0 0.0
      %652 = vmatprep.subr.mxu0 0.0
      %653 = vmatpush1.msra.mxu0 0.0
      %654 = vmatprep.subr.mxu0 0.0
      %655 = vmatpush1.msra.mxu0 0.0
      %656 = vmatprep.subr.mxu0 0.0
      %657 = vmatpush1.msra.mxu0 0.0
      %658 = vmatprep.subr.mxu0 0.0
      %659 = vmatpush1.msra.mxu0 0.0
      %660 = vmatprep.subr.mxu0 0.0
      %661 = vmatpush1.msra.mxu0 0.0
      %662 = vmatprep.subr.mxu0 0.0
      %663 = vmatpush1.msra.mxu0 0.0
      %664 = vmatprep.subr.mxu0 0.0
      %665 = vmatpush1.msra.mxu0 0.0
      %666 = vmatprep.subr.mxu0 0.0
      %667 = vmatpush1.msra.mxu0 0.0
      %668 = vmatprep.subr.mxu0 0.0
      %669 = vmatpush1.msra.mxu0 0.0
      %670 = vmatprep.subr.mxu0 0.0
      %671 = vmatpush1.msra.mxu0 0.0
      %672 = vmatprep.subr.mxu0 0.0
      %673 = vmatpush1.msra.mxu0 0.0
      %674 = vmatprep.subr.mxu0 0.0
      %675 = vmatpush1.msra.mxu0 0.0
      %676 = vmatprep.subr.mxu0 0.0
      %677 = vmatpush1.msra.mxu0 0.0
      %678 = vmatprep.subr.mxu0 0.0
      %679 = vmatpush1.msra.mxu0 0.0
      %680 = vmatprep.subr.mxu0 0.0
      %681 = vmatpush1.msra.mxu0 0.0
      %682 = vmatprep.subr.mxu0 0.0
      %683 = vmatpush1.msra.mxu0 0.0
      %684 = vmatprep.subr.mxu0 0.0
      %685 = vmatpush1.msra.mxu0 0.0
      %686 = vmatprep.subr.mxu0 0.0
      %687 = vmatpush1.msra.mxu0 0.0
      %688 = vmatprep.subr.mxu0 0.0
      %689 = vmatpush1.msra.mxu0 0.0
      %690 = vmatprep.subr.mxu0 0.0
      %691 = vmatpush1.msra.mxu0 0.0
      %692 = vmatprep.subr.mxu0 0.0
      %693 = vmatpush1.msra.mxu0 0.0
      %694 = vmatprep.subr.mxu0 0.0
      %695 = vmatpush1.msra.mxu0 0.0
      %696 = vmatprep.mubr.f32.mxu0 0.0
      %v697 = vand.u32 %v443, 4294901760
      %v698 = vsub.f32 %v443, %v697
      %699 = vmatmul.mubr.f32.gmra.mrb[0].mxu0 %v698
      %v700 = vpop.f32.mrb[0].mxu0
      %v701 = vadd.f32 %v620, %v700
      %v702 = vpop.f32.mrb[0].mxu0
      %v703 = vadd.f32 %v622, %v702
      %704 = vdwg.mxu0
      %v705 = vand.u32 %v438, 4294901760
      %706 = vmatprep.subr.mxu0 %v705
      %v707 = vand.u32 %v437, 4294901760
      %708 = vmatpush1.msra.mxu0 %v707
      %v709 = vand.u32 %v450, 4294901760
      %710 = vmatprep.subr.mxu0 %v709
      %v711 = vand.u32 %v447, 4294901760
      %712 = vmatpush1.msra.mxu0 %v711
      %713 = vmatprep.subr.mxu0 0.0
      %714 = vmatpush1.msra.mxu0 0.0
      %715 = vmatprep.subr.mxu0 0.0
      %716 = vmatpush1.msra.mxu0 0.0
      %717 = vmatprep.subr.mxu0 0.0
      %718 = vmatpush1.msra.mxu0 0.0
      %719 = vmatprep.subr.mxu0 0.0
      %720 = vmatpush1.msra.mxu0 0.0
      %721 = vmatprep.subr.mxu0 0.0
      %722 = vmatpush1.msra.mxu0 0.0
      %723 = vmatprep.subr.mxu0 0.0
      %724 = vmatpush1.msra.mxu0 0.0
      %725 = vmatprep.subr.mxu0 0.0
      %726 = vmatpush1.msra.mxu0 0.0
      %727 = vmatprep.subr.mxu0 0.0
      %728 = vmatpush1.msra.mxu0 0.0
      %729 = vmatprep.subr.mxu0 0.0
      %730 = vmatpush1.msra.mxu0 0.0
      %731 = vmatprep.subr.mxu0 0.0
      %732 = vmatpush1.msra.mxu0 0.0
      %733 = vmatprep.subr.mxu0 0.0
      %734 = vmatpush1.msra.mxu0 0.0
      %735 = vmatprep.subr.mxu0 0.0
      %736 = vmatpush1.msra.mxu0 0.0
      %737 = vmatprep.subr.mxu0 0.0
      %738 = vmatpush1.msra.mxu0 0.0
      %739 = vmatprep.subr.mxu0 0.0
      %740 = vmatpush1.msra.mxu0 0.0
      %741 = vmatprep.subr.mxu0 0.0
      %742 = vmatpush1.msra.mxu0 0.0
      %743 = vmatprep.subr.mxu0 0.0
      %744 = vmatpush1.msra.mxu0 0.0
      %745 = vmatprep.subr.mxu0 0.0
      %746 = vmatpush1.msra.mxu0 0.0
      %747 = vmatprep.subr.mxu0 0.0
      %748 = vmatpush1.msra.mxu0 0.0
      %749 = vmatprep.subr.mxu0 0.0
      %750 = vmatpush1.msra.mxu0 0.0
      %751 = vmatprep.subr.mxu0 0.0
      %752 = vmatpush1.msra.mxu0 0.0
      %753 = vmatprep.subr.mxu0 0.0
      %754 = vmatpush1.msra.mxu0 0.0
      %755 = vmatprep.subr.mxu0 0.0
      %756 = vmatpush1.msra.mxu0 0.0
      %757 = vmatprep.subr.mxu0 0.0
      %758 = vmatpush1.msra.mxu0 0.0
      %759 = vmatprep.subr.mxu0 0.0
      %760 = vmatpush1.msra.mxu0 0.0
      %761 = vmatprep.subr.mxu0 0.0
      %762 = vmatpush1.msra.mxu0 0.0
      %763 = vmatprep.subr.mxu0 0.0
      %764 = vmatpush1.msra.mxu0 0.0
      %765 = vmatprep.subr.mxu0 0.0
      %766 = vmatpush1.msra.mxu0 0.0
      %767 = vmatprep.subr.mxu0 0.0
      %768 = vmatpush1.msra.mxu0 0.0
      %769 = vmatprep.subr.mxu0 0.0
      %770 = vmatpush1.msra.mxu0 0.0
      %771 = vmatprep.subr.mxu0 0.0
      %772 = vmatpush1.msra.mxu0 0.0
      %773 = vmatprep.mubr.f32.mxu0 0.0
      %v774 = vand.u32 %v443, 4294901760
      %v775 = vsub.f32 %v443, %v774
      %v776 = vand.u32 %v775, 4294901760
      %777 = vmatmul.mubr.f32.gmra.mrb[0].mxu0 %v776
      %v778 = vpop.f32.mrb[0].mxu0
      %v779 = vadd.f32 %v701, %v778
      %v780 = vpop.f32.mrb[0].mxu0
      %v781 = vadd.f32 %v703, %v780
      %782 = vdwg.mxu0
      %v783 = vand.u32 %v438, 4294901760
      %v784 = vsub.f32 %v438, %v783
      %v785 = vand.u32 %v784, 4294901760
      %786 = vmatprep.subr.mxu0 %v785
      %v787 = vand.u32 %v437, 4294901760
      %v788 = vsub.f32 %v437, %v787
      %v789 = vand.u32 %v788, 4294901760
      %790 = vmatpush1.msra.mxu0 %v789
      %v791 = vand.u32 %v450, 4294901760
      %v792 = vsub.f32 %v450, %v791
      %v793 = vand.u32 %v792, 4294901760
      %794 = vmatprep.subr.mxu0 %v793
      %v795 = vand.u32 %v447, 4294901760
      %v796 = vsub.f32 %v447, %v795
      %v797 = vand.u32 %v796, 4294901760
      %798 = vmatpush1.msra.mxu0 %v797
      %799 = vmatprep.subr.mxu0 0.0
      %800 = vmatpush1.msra.mxu0 0.0
      %801 = vmatprep.subr.mxu0 0.0
      %802 = vmatpush1.msra.mxu0 0.0
      %803 = vmatprep.subr.mxu0 0.0
      %804 = vmatpush1.msra.mxu0 0.0
      %805 = vmatprep.subr.mxu0 0.0
      %806 = vmatpush1.msra.mxu0 0.0
      %807 = vmatprep.subr.mxu0 0.0
      %808 = vmatpush1.msra.mxu0 0.0
      %809 = vmatprep.subr.mxu0 0.0
      %810 = vmatpush1.msra.mxu0 0.0
      %811 = vmatprep.subr.mxu0 0.0
      %812 = vmatpush1.msra.mxu0 0.0
      %813 = vmatprep.subr.mxu0 0.0
      %814 = vmatpush1.msra.mxu0 0.0
      %815 = vmatprep.subr.mxu0 0.0
      %816 = vmatpush1.msra.mxu0 0.0
      %817 = vmatprep.subr.mxu0 0.0
      %818 = vmatpush1.msra.mxu0 0.0
      %819 = vmatprep.subr.mxu0 0.0
      %820 = vmatpush1.msra.mxu0 0.0
      %821 = vmatprep.subr.mxu0 0.0
      %822 = vmatpush1.msra.mxu0 0.0
      %823 = vmatprep.subr.mxu0 0.0
      %824 = vmatpush1.msra.mxu0 0.0
      %825 = vmatprep.subr.mxu0 0.0
      %826 = vmatpush1.msra.mxu0 0.0
      %827 = vmatprep.subr.mxu0 0.0
      %828 = vmatpush1.msra.mxu0 0.0
      %829 = vmatprep.subr.mxu0 0.0
      %830 = vmatpush1.msra.mxu0 0.0
      %831 = vmatprep.subr.mxu0 0.0
      %832 = vmatpush1.msra.mxu0 0.0
      %833 = vmatprep.subr.mxu0 0.0
      %834 = vmatpush1.msra.mxu0 0.0
      %835 = vmatprep.subr.mxu0 0.0
      %836 = vmatpush1.msra.mxu0 0.0
      %837 = vmatprep.subr.mxu0 0.0
      %838 = vmatpush1.msra.mxu0 0.0
      %839 = vmatprep.subr.mxu0 0.0
      %840 = vmatpush1.msra.mxu0 0.0
      %841 = vmatprep.subr.mxu0 0.0
      %842 = vmatpush1.msra.mxu0 0.0
      %843 = vmatprep.subr.mxu0 0.0
      %844 = vmatpush1.msra.mxu0 0.0
      %845 = vmatprep.subr.mxu0 0.0
      %846 = vmatpush1.msra.mxu0 0.0
      %847 = vmatprep.subr.mxu0 0.0
      %848 = vmatpush1.msra.mxu0 0.0
      %849 = vmatprep.subr.mxu0 0.0
      %850 = vmatpush1.msra.mxu0 0.0
      %851 = vmatprep.subr.mxu0 0.0
      %852 = vmatpush1.msra.mxu0 0.0
      %853 = vmatprep.subr.mxu0 0.0
      %854 = vmatpush1.msra.mxu0 0.0
      %855 = vmatprep.subr.mxu0 0.0
      %856 = vmatpush1.msra.mxu0 0.0
      %857 = vmatprep.subr.mxu0 0.0
      %858 = vmatpush1.msra.mxu0 0.0
      %859 = vmatprep.mubr.f32.mxu0 0.0
      %v860 = vand.u32 %v443, 4294901760
      %861 = vmatmul.mubr.f32.gmra.mrb[0].mxu0 %v860
      %v862 = vpop.f32.mrb[0].mxu0
      %v863 = vadd.f32 %v779, %v862
      %v864 = vpop.f32.mrb[0].mxu0
      %v865 = vadd.f32 %v781, %v864
      %866 = vdwg.mxu0
      %v867 = vand.u32 %v438, 4294901760
      %868 = vmatprep.subr.mxu0 %v867
      %v869 = vand.u32 %v437, 4294901760
      %870 = vmatpush1.msra.mxu0 %v869
      %v871 = vand.u32 %v450, 4294901760
      %872 = vmatprep.subr.mxu0 %v871
      %v873 = vand.u32 %v447, 4294901760
      %874 = vmatpush1.msra.mxu0 %v873
      %875 = vmatprep.subr.mxu0 0.0
      %876 = vmatpush1.msra.mxu0 0.0
      %877 = vmatprep.subr.mxu0 0.0
      %878 = vmatpush1.msra.mxu0 0.0
      %879 = vmatprep.subr.mxu0 0.0
      %880 = vmatpush1.msra.mxu0 0.0
      %881 = vmatprep.subr.mxu0 0.0
      %882 = vmatpush1.msra.mxu0 0.0
      %883 = vmatprep.subr.mxu0 0.0
      %884 = vmatpush1.msra.mxu0 0.0
      %885 = vmatprep.subr.mxu0 0.0
      %886 = vmatpush1.msra.mxu0 0.0
      %887 = vmatprep.subr.mxu0 0.0
      %888 = vmatpush1.msra.mxu0 0.0
      %889 = vmatprep.subr.mxu0 0.0
      %890 = vmatpush1.msra.mxu0 0.0
      %891 = vmatprep.subr.mxu0 0.0
      %892 = vmatpush1.msra.mxu0 0.0
      %893 = vmatprep.subr.mxu0 0.0
      %894 = vmatpush1.msra.mxu0 0.0
      %895 = vmatprep.subr.mxu0 0.0
      %896 = vmatpush1.msra.mxu0 0.0
      %897 = vmatprep.subr.mxu0 0.0
      %898 = vmatpush1.msra.mxu0 0.0
      %899 = vmatprep.subr.mxu0 0.0
      %900 = vmatpush1.msra.mxu0 0.0
      %901 = vmatprep.subr.mxu0 0.0
      %902 = vmatpush1.msra.mxu0 0.0
      %903 = vmatprep.subr.mxu0 0.0
      %904 = vmatpush1.msra.mxu0 0.0
      %905 = vmatprep.subr.mxu0 0.0
      %906 = vmatpush1.msra.mxu0 0.0
      %907 = vmatprep.subr.mxu0 0.0
      %908 = vmatpush1.msra.mxu0 0.0
      %909 = vmatprep.subr.mxu0 0.0
      %910 = vmatpush1.msra.mxu0 0.0
      %911 = vmatprep.subr.mxu0 0.0
      %912 = vmatpush1.msra.mxu0 0.0
      %913 = vmatprep.subr.mxu0 0.0
      %914 = vmatpush1.msra.mxu0 0.0
      %915 = vmatprep.subr.mxu0 0.0
      %916 = vmatpush1.msra.mxu0 0.0
      %917 = vmatprep.subr.mxu0 0.0
      %918 = vmatpush1.msra.mxu0 0.0
      %919 = vmatprep.subr.mxu0 0.0
      %920 = vmatpush1.msra.mxu0 0.0
      %921 = vmatprep.subr.mxu0 0.0
      %922 = vmatpush1.msra.mxu0 0.0
      %923 = vmatprep.subr.mxu0 0.0
      %924 = vmatpush1.msra.mxu0 0.0
      %925 = vmatprep.subr.mxu0 0.0
      %926 = vmatpush1.msra.mxu0 0.0
      %927 = vmatprep.subr.mxu0 0.0
      %928 = vmatpush1.msra.mxu0 0.0
      %929 = vmatprep.subr.mxu0 0.0
      %930 = vmatpush1.msra.mxu0 0.0
      %931 = vmatprep.subr.mxu0 0.0
      %932 = vmatpush1.msra.mxu0 0.0
      %933 = vmatprep.subr.mxu0 0.0
      %934 = vmatpush1.msra.mxu0 0.0
      %935 = vmatprep.mubr.f32.mxu0 0.0
      %v936 = vand.u32 %v443, 4294901760
      %937 = vmatmul.mubr.f32.gmra.mrb[0].mxu0 %v936
      %v938 = vpop.f32.mrb[0].mxu0
      %v939 = vadd.f32 %v863, %v938
      %v940 = vpop.f32.mrb[0].mxu0
      %v941 = vadd.f32 %v865, %v940
      %942 = vdwg.mxu0
      %v943 = vmax.f32 %v939, 0.0
      %v944 = vmax.f32 %v941, 0.0
      %v945 = vsel %vm168, %v943, 0.0
      %v946 = vsel %vm169, %v944, 0.0
      %v947 = vsel %vm170, %v943, 0.0
      %v948 = vsel %vm171, %v944, 0.0
      %951 = vrot.lane.b32.xlu0 %v945, 17
      %v952 = vpop.permute.xlu0 %951
      %953 = vrot.lane.b32.xlu0 %v946, 17
      %v954 = vpop.permute.xlu0 %953
      %v955 = vsel %vm209, %v952, %v954
      %v958 = vsel %vm209, 0.0, %v952
      %959 = vst [vmem:[#allocation2] sm:$0xff] %v958
      %960 = vst [vmem:[#allocation2 + $0x8] sm:$0xff] %v955
      %963 = vrot.lane.b32.xlu0 %v943, 16
      %v964 = vpop.permute.xlu0 %963
      %965 = vrot.lane.b32.xlu0 %v944, 16
      %v966 = vpop.permute.xlu0 %965
      %v967 = vsel %vm217, %v964, %v966
      %v970 = vsel %vm217, 0.0, %v964
      %971 = vst [vmem:[#allocation2 + $0x10] sm:$0xff] %v970
      %972 = vst [vmem:[#allocation2 + $0x18] sm:$0xff] %v967
      %975 = vrot.lane.b32.xlu0 %v947, 15
      %v976 = vpop.permute.xlu0 %975
      %977 = vrot.lane.b32.xlu0 %v948, 15
      %v978 = vpop.permute.xlu0 %977
      %v979 = vsel %vm227, %v976, %v978
      %v982 = vsel %vm227, 0.0, %v976
      %983 = vst [vmem:[#allocation2 + $0x20] sm:$0xff] %v982
      %984 = vst [vmem:[#allocation2 + $0x28] sm:$0xff] %v979
      %985 = vrot.lane.b32.xlu0 %v945, 1
      %v986 = vpop.permute.xlu0 %985
      %987 = vrot.lane.b32.xlu0 %v946, 1
      %v988 = vpop.permute.xlu0 %987
      %v989 = vsel %vm235, %v986, %v988
      %v992 = vsel %vm235, 0.0, %v986
      %993 = vst [vmem:[#allocation2 + $0x30] sm:$0xff] %v992
      %994 = vst [vmem:[#allocation2 + $0x38] sm:$0xff] %v989
      %995 = vst [vmem:[#allocation2 + $0x40] sm:$0xff] %v943
      %996 = vst [vmem:[#allocation2 + $0x48] sm:$0xff] %v944
      %997 = vrot.lane.b32.xlu0 %v947, 127
      %v998 = vpop.permute.xlu0 %997
      %999 = vrot.lane.b32.xlu0 %v948, 127
      %v1000 = vpop.permute.xlu0 %999
      %v1001 = vsel %vm243, %v998, %v1000
      %v1004 = vsel %vm243, %v1000, 0.0
      %1005 = vst [vmem:[#allocation2 + $0x50] sm:$0xff] %v1001
      %1006 = vst [vmem:[#allocation2 + $0x58] sm:$0xff] %v1004
      %1007 = vrot.lane.b32.xlu0 %v945, 113
      %v1008 = vpop.permute.xlu0 %1007
      %1009 = vrot.lane.b32.xlu0 %v946, 113
      %v1010 = vpop.permute.xlu0 %1009
      %v1011 = vsel %vm251, %v1008, %v1010
      %v1014 = vsel %vm251, %v1010, 0.0
      %1015 = vst [vmem:[#allocation2 + $0x60] sm:$0xff] %v1011
      %1016 = vst [vmem:[#allocation2 + $0x68] sm:$0xff] %v1014
      %1017 = vrot.lane.b32.xlu0 %v943, 112
      %v1018 = vpop.permute.xlu0 %1017
      %1019 = vrot.lane.b32.xlu0 %v944, 112
      %v1020 = vpop.permute.xlu0 %1019
      %v1021 = vsel %vm259, %v1018, %v1020
      %v1024 = vsel %vm259, %v1020, 0.0
      %1025 = vst [vmem:[#allocation2 + $0x70] sm:$0xff] %v1021
      %1026 = vst [vmem:[#allocation2 + $0x78] sm:$0xff] %v1024
      %1027 = vrot.lane.b32.xlu0 %v947, 111
      %v1028 = vpop.permute.xlu0 %1027
      %1029 = vrot.lane.b32.xlu0 %v948, 111
      %v1030 = vpop.permute.xlu0 %1029
      %v1031 = vsel %vm267, %v1028, %v1030
      %v1034 = vsel %vm267, %v1030, 0.0
      %1035 = vst [vmem:[#allocation2 + $0x80] sm:$0xff] %v1031
      %1036 = vst [vmem:[#allocation2 + $0x88] sm:$0xff] %v1034
      %v1037 = vld [vmem:[#allocation2] sm:$0xff]
      %v1038 = vld [vmem:[#allocation2 + $0x8] sm:$0xff]
      %v1039 = vld [vmem:[#allocation2 + $0x10] sm:$0xff]
      %v1040 = vld [vmem:[#allocation2 + $0x18] sm:$0xff]
      %v1041 = vld [vmem:[#allocation2 + $0x20] sm:$0xff]
      %v1042 = vld [vmem:[#allocation2 + $0x28] sm:$0xff]
      %v1043 = vld [vmem:[#allocation2 + $0x30] sm:$0xff]
      %v1044 = vld [vmem:[#allocation2 + $0x38] sm:$0xff]
      %v1045 = vld [vmem:[#allocation2 + $0x40] sm:$0xff]
      %v1046 = vld [vmem:[#allocation2 + $0x48] sm:$0xff]
      %v1047 = vld [vmem:[#allocation2 + $0x50] sm:$0xff]
      %v1048 = vld [vmem:[#allocation2 + $0x58] sm:$0xff]
      %v1049 = vld [vmem:[#allocation2 + $0x60] sm:$0xff]
      %v1050 = vld [vmem:[#allocation2 + $0x68] sm:$0xff]
      %v1051 = vld [vmem:[#allocation2 + $0x70] sm:$0xff]
      %v1052 = vld [vmem:[#allocation2 + $0x78] sm:$0xff]
      %v1053 = vld [vmem:[#allocation2 + $0x80] sm:$0xff]
      %v1054 = vld [vmem:[#allocation2 + $0x88] sm:$0xff]
      %1055 = vrot.lane.b32.xlu0 %v172, 119
      %v1056 = vpop.permute.xlu0 %1055
      %vm1057 = vcmask 588800
      %v1058 = vsel %vm1057, %v1056, 0
      %v1060 = vand.u32 %v1038, 4294901760
      %1061 = vmatprep.subr.mxu0 %v1060
      %v1062 = vand.u32 %v1037, 4294901760
      %1063 = vmatpush1.msra.mxu0 %v1062
      %v1064 = vand.u32 %v1040, 4294901760
      %1065 = vmatprep.subr.mxu0 %v1064
      %v1066 = vand.u32 %v1039, 4294901760
      %1067 = vmatpush1.msra.mxu0 %v1066
      %v1068 = vand.u32 %v1042, 4294901760
      %1069 = vmatprep.subr.mxu0 %v1068
      %v1070 = vand.u32 %v1041, 4294901760
      %1071 = vmatpush1.msra.mxu0 %v1070
      %v1072 = vand.u32 %v1044, 4294901760
      %1073 = vmatprep.subr.mxu0 %v1072
      %v1074 = vand.u32 %v1043, 4294901760
      %1075 = vmatpush1.msra.mxu0 %v1074
      %v1076 = vand.u32 %v1046, 4294901760
      %1077 = vmatprep.subr.mxu0 %v1076
      %v1078 = vand.u32 %v1045, 4294901760
      %1079 = vmatpush1.msra.mxu0 %v1078
      %v1080 = vand.u32 %v1048, 4294901760
      %1081 = vmatprep.subr.mxu0 %v1080
      %v1082 = vand.u32 %v1047, 4294901760
      %1083 = vmatpush1.msra.mxu0 %v1082
      %v1084 = vand.u32 %v1050, 4294901760
      %1085 = vmatprep.subr.mxu0 %v1084
      %v1086 = vand.u32 %v1049, 4294901760
      %1087 = vmatpush1.msra.mxu0 %v1086
      %v1088 = vand.u32 %v1052, 4294901760
      %1089 = vmatprep.subr.mxu0 %v1088
      %v1090 = vand.u32 %v1051, 4294901760
      %1091 = vmatpush1.msra.mxu0 %v1090
      %v1092 = vand.u32 %v1054, 4294901760
      %1093 = vmatprep.subr.mxu0 %v1092
      %v1094 = vand.u32 %v1053, 4294901760
      %1095 = vmatpush1.msra.mxu0 %v1094
      %1096 = vmatprep.subr.mxu0 0.0
      %1097 = vmatpush1.msra.mxu0 0.0
      %1098 = vmatprep.subr.mxu0 0.0
      %1099 = vmatpush1.msra.mxu0 0.0
      %1100 = vmatprep.subr.mxu0 0.0
      %1101 = vmatpush1.msra.mxu0 0.0
      %1102 = vmatprep.subr.mxu0 0.0
      %1103 = vmatpush1.msra.mxu0 0.0
      %1104 = vmatprep.subr.mxu0 0.0
      %1105 = vmatpush1.msra.mxu0 0.0
      %1106 = vmatprep.subr.mxu0 0.0
      %1107 = vmatpush1.msra.mxu0 0.0
      %1108 = vmatprep.subr.mxu0 0.0
      %1109 = vmatpush1.msra.mxu0 0.0
      %1110 = vmatprep.subr.mxu0 0.0
      %1111 = vmatpush1.msra.mxu0 0.0
      %1112 = vmatprep.subr.mxu0 0.0
      %1113 = vmatpush1.msra.mxu0 0.0
      %1114 = vmatprep.subr.mxu0 0.0
      %1115 = vmatpush1.msra.mxu0 0.0
      %1116 = vmatprep.subr.mxu0 0.0
      %1117 = vmatpush1.msra.mxu0 0.0
      %1118 = vmatprep.subr.mxu0 0.0
      %1119 = vmatpush1.msra.mxu0 0.0
      %1120 = vmatprep.subr.mxu0 0.0
      %1121 = vmatpush1.msra.mxu0 0.0
      %1122 = vmatprep.subr.mxu0 0.0
      %1123 = vmatpush1.msra.mxu0 0.0
      %1124 = vmatprep.subr.mxu0 0.0
      %1125 = vmatpush1.msra.mxu0 0.0
      %1126 = vmatprep.subr.mxu0 0.0
      %1127 = vmatpush1.msra.mxu0 0.0
      %1128 = vmatprep.subr.mxu0 0.0
      %1129 = vmatpush1.msra.mxu0 0.0
      %1130 = vmatprep.subr.mxu0 0.0
      %1131 = vmatpush1.msra.mxu0 0.0
      %1132 = vmatprep.subr.mxu0 0.0
      %1133 = vmatpush1.msra.mxu0 0.0
      %1134 = vmatprep.subr.mxu0 0.0
      %1135 = vmatpush1.msra.mxu0 0.0
      %1136 = vmatprep.subr.mxu0 0.0
      %1137 = vmatpush1.msra.mxu0 0.0
      %1138 = vmatprep.subr.mxu0 0.0
      %1139 = vmatpush1.msra.mxu0 0.0
      %1140 = vmatprep.subr.mxu0 0.0
      %1141 = vmatpush1.msra.mxu0 0.0
      %1142 = vmatprep.mubr.f32.mxu0 0.0
      %v1143 = vand.u32 %v1058, 4294901760
      %v1144 = vsub.f32 %v1058, %v1143
      %v1145 = vand.u32 %v1144, 4294901760
      %v1146 = vsub.f32 %v1144, %v1145
      %v1147 = vand.u32 %v1146, 4294901760
      %1148 = vmatmul.mubr.f32.gmra.mrb[0].mxu0 %v1147
      %v1149 = vpop.f32.mrb[0].mxu0
      %v1150 = vadd.f32 %v181, %v1149
      %v1151 = vpop.f32.mrb[0].mxu0
      %v1152 = vadd.f32 %v181, %v1151
      %1153 = vdwg.mxu0
      %v1154 = vand.u32 %v1038, 4294901760
      %v1155 = vsub.f32 %v1038, %v1154
      %v1156 = vand.u32 %v1155, 4294901760
      %v1157 = vsub.f32 %v1155, %v1156
      %v1158 = vand.u32 %v1157, 4294901760
      %1159 = vmatprep.subr.mxu0 %v1158
      %v1160 = vand.u32 %v1037, 4294901760
      %v1161 = vsub.f32 %v1037, %v1160
      %v1162 = vand.u32 %v1161, 4294901760
      %v1163 = vsub.f32 %v1161, %v1162
      %v1164 = vand.u32 %v1163, 4294901760
      %1165 = vmatpush1.msra.mxu0 %v1164
      %v1166 = vand.u32 %v1040, 4294901760
      %v1167 = vsub.f32 %v1040, %v1166
      %v1168 = vand.u32 %v1167, 4294901760
      %v1169 = vsub.f32 %v1167, %v1168
      %v1170 = vand.u32 %v1169, 4294901760
      %1171 = vmatprep.subr.mxu0 %v1170
      %v1172 = vand.u32 %v1039, 4294901760
      %v1173 = vsub.f32 %v1039, %v1172
      %v1174 = vand.u32 %v1173, 4294901760
      %v1175 = vsub.f32 %v1173, %v1174
      %v1176 = vand.u32 %v1175, 4294901760
      %1177 = vmatpush1.msra.mxu0 %v1176
      %v1178 = vand.u32 %v1042, 4294901760
      %v1179 = vsub.f32 %v1042, %v1178
      %v1180 = vand.u32 %v1179, 4294901760
      %v1181 = vsub.f32 %v1179, %v1180
      %v1182 = vand.u32 %v1181, 4294901760
      %1183 = vmatprep.subr.mxu0 %v1182
      %v1184 = vand.u32 %v1041, 4294901760
      %v1185 = vsub.f32 %v1041, %v1184
      %v1186 = vand.u32 %v1185, 4294901760
      %v1187 = vsub.f32 %v1185, %v1186
      %v1188 = vand.u32 %v1187, 4294901760
      %1189 = vmatpush1.msra.mxu0 %v1188
      %v1190 = vand.u32 %v1044, 4294901760
      %v1191 = vsub.f32 %v1044, %v1190
      %v1192 = vand.u32 %v1191, 4294901760
      %v1193 = vsub.f32 %v1191, %v1192
      %v1194 = vand.u32 %v1193, 4294901760
      %1195 = vmatprep.subr.mxu0 %v1194
      %v1196 = vand.u32 %v1043, 4294901760
      %v1197 = vsub.f32 %v1043, %v1196
      %v1198 = vand.u32 %v1197, 4294901760
      %v1199 = vsub.f32 %v1197, %v1198
      %v1200 = vand.u32 %v1199, 4294901760
      %1201 = vmatpush1.msra.mxu0 %v1200
      %v1202 = vand.u32 %v1046, 4294901760
      %v1203 = vsub.f32 %v1046, %v1202
      %v1204 = vand.u32 %v1203, 4294901760
      %v1205 = vsub.f32 %v1203, %v1204
      %v1206 = vand.u32 %v1205, 4294901760
      %1207 = vmatprep.subr.mxu0 %v1206
      %v1208 = vand.u32 %v1045, 4294901760
      %v1209 = vsub.f32 %v1045, %v1208
      %v1210 = vand.u32 %v1209, 4294901760
      %v1211 = vsub.f32 %v1209, %v1210
      %v1212 = vand.u32 %v1211, 4294901760
      %1213 = vmatpush1.msra.mxu0 %v1212
      %v1214 = vand.u32 %v1048, 4294901760
      %v1215 = vsub.f32 %v1048, %v1214
      %v1216 = vand.u32 %v1215, 4294901760
      %v1217 = vsub.f32 %v1215, %v1216
      %v1218 = vand.u32 %v1217, 4294901760
      %1219 = vmatprep.subr.mxu0 %v1218
      %v1220 = vand.u32 %v1047, 4294901760
      %v1221 = vsub.f32 %v1047, %v1220
      %v1222 = vand.u32 %v1221, 4294901760
      %v1223 = vsub.f32 %v1221, %v1222
      %v1224 = vand.u32 %v1223, 4294901760
      %1225 = vmatpush1.msra.mxu0 %v1224
      %v1226 = vand.u32 %v1050, 4294901760
      %v1227 = vsub.f32 %v1050, %v1226
      %v1228 = vand.u32 %v1227, 4294901760
      %v1229 = vsub.f32 %v1227, %v1228
      %v1230 = vand.u32 %v1229, 4294901760
      %1231 = vmatprep.subr.mxu0 %v1230
      %v1232 = vand.u32 %v1049, 4294901760
      %v1233 = vsub.f32 %v1049, %v1232
      %v1234 = vand.u32 %v1233, 4294901760
      %v1235 = vsub.f32 %v1233, %v1234
      %v1236 = vand.u32 %v1235, 4294901760
      %1237 = vmatpush1.msra.mxu0 %v1236
      %v1238 = vand.u32 %v1052, 4294901760
      %v1239 = vsub.f32 %v1052, %v1238
      %v1240 = vand.u32 %v1239, 4294901760
      %v1241 = vsub.f32 %v1239, %v1240
      %v1242 = vand.u32 %v1241, 4294901760
      %1243 = vmatprep.subr.mxu0 %v1242
      %v1244 = vand.u32 %v1051, 4294901760
      %v1245 = vsub.f32 %v1051, %v1244
      %v1246 = vand.u32 %v1245, 4294901760
      %v1247 = vsub.f32 %v1245, %v1246
      %v1248 = vand.u32 %v1247, 4294901760
      %1249 = vmatpush1.msra.mxu0 %v1248
      %v1250 = vand.u32 %v1054, 4294901760
      %v1251 = vsub.f32 %v1054, %v1250
      %v1252 = vand.u32 %v1251, 4294901760
      %v1253 = vsub.f32 %v1251, %v1252
      %v1254 = vand.u32 %v1253, 4294901760
      %1255 = vmatprep.subr.mxu0 %v1254
      %v1256 = vand.u32 %v1053, 4294901760
      %v1257 = vsub.f32 %v1053, %v1256
      %v1258 = vand.u32 %v1257, 4294901760
      %v1259 = vsub.f32 %v1257, %v1258
      %v1260 = vand.u32 %v1259, 4294901760
      %1261 = vmatpush1.msra.mxu0 %v1260
      %1262 = vmatprep.subr.mxu0 0.0
      %1263 = vmatpush1.msra.mxu0 0.0
      %1264 = vmatprep.subr.mxu0 0.0
      %1265 = vmatpush1.msra.mxu0 0.0
      %1266 = vmatprep.subr.mxu0 0.0
      %1267 = vmatpush1.msra.mxu0 0.0
      %1268 = vmatprep.subr.mxu0 0.0
      %1269 = vmatpush1.msra.mxu0 0.0
      %1270 = vmatprep.subr.mxu0 0.0
      %1271 = vmatpush1.msra.mxu0 0.0
      %1272 = vmatprep.subr.mxu0 0.0
      %1273 = vmatpush1.msra.mxu0 0.0
      %1274 = vmatprep.subr.mxu0 0.0
      %1275 = vmatpush1.msra.mxu0 0.0
      %1276 = vmatprep.subr.mxu0 0.0
      %1277 = vmatpush1.msra.mxu0 0.0
      %1278 = vmatprep.subr.mxu0 0.0
      %1279 = vmatpush1.msra.mxu0 0.0
      %1280 = vmatprep.subr.mxu0 0.0
      %1281 = vmatpush1.msra.mxu0 0.0
      %1282 = vmatprep.subr.mxu0 0.0
      %1283 = vmatpush1.msra.mxu0 0.0
      %1284 = vmatprep.subr.mxu0 0.0
      %1285 = vmatpush1.msra.mxu0 0.0
      %1286 = vmatprep.subr.mxu0 0.0
      %1287 = vmatpush1.msra.mxu0 0.0
      %1288 = vmatprep.subr.mxu0 0.0
      %1289 = vmatpush1.msra.mxu0 0.0
      %1290 = vmatprep.subr.mxu0 0.0
      %1291 = vmatpush1.msra.mxu0 0.0
      %1292 = vmatprep.subr.mxu0 0.0
      %1293 = vmatpush1.msra.mxu0 0.0
      %1294 = vmatprep.subr.mxu0 0.0
      %1295 = vmatpush1.msra.mxu0 0.0
      %1296 = vmatprep.subr.mxu0 0.0
      %1297 = vmatpush1.msra.mxu0 0.0
      %1298 = vmatprep.subr.mxu0 0.0
      %1299 = vmatpush1.msra.mxu0 0.0
      %1300 = vmatprep.subr.mxu0 0.0
      %1301 = vmatpush1.msra.mxu0 0.0
      %1302 = vmatprep.subr.mxu0 0.0
      %1303 = vmatpush1.msra.mxu0 0.0
      %1304 = vmatprep.subr.mxu0 0.0
      %1305 = vmatpush1.msra.mxu0 0.0
      %1306 = vmatprep.subr.mxu0 0.0
      %1307 = vmatpush1.msra.mxu0 0.0
      %1308 = vmatprep.mubr.f32.mxu0 0.0
      %v1309 = vand.u32 %v1058, 4294901760
      %1310 = vmatmul.mubr.f32.gmra.mrb[0].mxu0 %v1309
      %v1311 = vpop.f32.mrb[0].mxu0
      %v1312 = vadd.f32 %v1150, %v1311
      %v1313 = vpop.f32.mrb[0].mxu0
      %v1314 = vadd.f32 %v1152, %v1313
      %1315 = vdwg.mxu0
      %v1316 = vand.u32 %v1038, 4294901760
      %v1317 = vsub.f32 %v1038, %v1316
      %1318 = vmatprep.subr.mxu0 %v1317
      %v1319 = vand.u32 %v1037, 4294901760
      %v1320 = vsub.f32 %v1037, %v1319
      %1321 = vmatpush1.msra.mxu0 %v1320
      %v1322 = vand.u32 %v1040, 4294901760
      %v1323 = vsub.f32 %v1040, %v1322
      %1324 = vmatprep.subr.mxu0 %v1323
      %v1325 = vand.u32 %v1039, 4294901760
      %v1326 = vsub.f32 %v1039, %v1325
      %1327 = vmatpush1.msra.mxu0 %v1326
      %v1328 = vand.u32 %v1042, 4294901760
      %v1329 = vsub.f32 %v1042, %v1328
      %1330 = vmatprep.subr.mxu0 %v1329
      %v1331 = vand.u32 %v1041, 4294901760
      %v1332 = vsub.f32 %v1041, %v1331
      %1333 = vmatpush1.msra.mxu0 %v1332
      %v1334 = vand.u32 %v1044, 4294901760
      %v1335 = vsub.f32 %v1044, %v1334
      %1336 = vmatprep.subr.mxu0 %v1335
      %v1337 = vand.u32 %v1043, 4294901760
      %v1338 = vsub.f32 %v1043, %v1337
      %1339 = vmatpush1.msra.mxu0 %v1338
      %v1340 = vand.u32 %v1046, 4294901760
      %v1341 = vsub.f32 %v1046, %v1340
      %1342 = vmatprep.subr.mxu0 %v1341
      %v1343 = vand.u32 %v1045, 4294901760
      %v1344 = vsub.f32 %v1045, %v1343
      %1345 = vmatpush1.msra.mxu0 %v1344
      %v1346 = vand.u32 %v1048, 4294901760
      %v1347 = vsub.f32 %v1048, %v1346
      %1348 = vmatprep.subr.mxu0 %v1347
      %v1349 = vand.u32 %v1047, 4294901760
      %v1350 = vsub.f32 %v1047, %v1349
      %1351 = vmatpush1.msra.mxu0 %v1350
      %v1352 = vand.u32 %v1050, 4294901760
      %v1353 = vsub.f32 %v1050, %v1352
      %1354 = vmatprep.subr.mxu0 %v1353
      %v1355 = vand.u32 %v1049, 4294901760
      %v1356 = vsub.f32 %v1049, %v1355
      %1357 = vmatpush1.msra.mxu0 %v1356
      %v1358 = vand.u32 %v1052, 4294901760
      %v1359 = vsub.f32 %v1052, %v1358
      %1360 = vmatprep.subr.mxu0 %v1359
      %v1361 = vand.u32 %v1051, 4294901760
      %v1362 = vsub.f32 %v1051, %v1361
      %1363 = vmatpush1.msra.mxu0 %v1362
      %v1364 = vand.u32 %v1054, 4294901760
      %v1365 = vsub.f32 %v1054, %v1364
      %1366 = vmatprep.subr.mxu0 %v1365
      %v1367 = vand.u32 %v1053, 4294901760
      %v1368 = vsub.f32 %v1053, %v1367
      %1369 = vmatpush1.msra.mxu0 %v1368
      %1370 = vmatprep.subr.mxu0 0.0
      %1371 = vmatpush1.msra.mxu0 0.0
      %1372 = vmatprep.subr.mxu0 0.0
      %1373 = vmatpush1.msra.mxu0 0.0
      %1374 = vmatprep.subr.mxu0 0.0
      %1375 = vmatpush1.msra.mxu0 0.0
      %1376 = vmatprep.subr.mxu0 0.0
      %1377 = vmatpush1.msra.mxu0 0.0
      %1378 = vmatprep.subr.mxu0 0.0
      %1379 = vmatpush1.msra.mxu0 0.0
      %1380 = vmatprep.subr.mxu0 0.0
      %1381 = vmatpush1.msra.mxu0 0.0
      %1382 = vmatprep.subr.mxu0 0.0
      %1383 = vmatpush1.msra.mxu0 0.0
      %1384 = vmatprep.subr.mxu0 0.0
      %1385 = vmatpush1.msra.mxu0 0.0
      %1386 = vmatprep.subr.mxu0 0.0
      %1387 = vmatpush1.msra.mxu0 0.0
      %1388 = vmatprep.subr.mxu0 0.0
      %1389 = vmatpush1.msra.mxu0 0.0
      %1390 = vmatprep.subr.mxu0 0.0
      %1391 = vmatpush1.msra.mxu0 0.0
      %1392 = vmatprep.subr.mxu0 0.0
      %1393 = vmatpush1.msra.mxu0 0.0
      %1394 = vmatprep.subr.mxu0 0.0
      %1395 = vmatpush1.msra.mxu0 0.0
      %1396 = vmatprep.subr.mxu0 0.0
      %1397 = vmatpush1.msra.mxu0 0.0
      %1398 = vmatprep.subr.mxu0 0.0
      %1399 = vmatpush1.msra.mxu0 0.0
      %1400 = vmatprep.subr.mxu0 0.0
      %1401 = vmatpush1.msra.mxu0 0.0
      %1402 = vmatprep.subr.mxu0 0.0
      %1403 = vmatpush1.msra.mxu0 0.0
      %1404 = vmatprep.subr.mxu0 0.0
      %1405 = vmatpush1.msra.mxu0 0.0
      %1406 = vmatprep.subr.mxu0 0.0
      %1407 = vmatpush1.msra.mxu0 0.0
      %1408 = vmatprep.subr.mxu0 0.0
      %1409 = vmatpush1.msra.mxu0 0.0
      %1410 = vmatprep.subr.mxu0 0.0
      %1411 = vmatpush1.msra.mxu0 0.0
      %1412 = vmatprep.subr.mxu0 0.0
      %1413 = vmatpush1.msra.mxu0 0.0
      %1414 = vmatprep.subr.mxu0 0.0
      %1415 = vmatpush1.msra.mxu0 0.0
      %1416 = vmatprep.mubr.f32.mxu0 0.0
      %v1417 = vand.u32 %v1058, 4294901760
      %v1418 = vsub.f32 %v1058, %v1417
      %1419 = vmatmul.mubr.f32.gmra.mrb[0].mxu0 %v1418
      %v1420 = vpop.f32.mrb[0].mxu0
      %v1421 = vadd.f32 %v1312, %v1420
      %v1422 = vpop.f32.mrb[0].mxu0
      %v1423 = vadd.f32 %v1314, %v1422
      %1424 = vdwg.mxu0
      %v1425 = vand.u32 %v1038, 4294901760
      %1426 = vmatprep.subr.mxu0 %v1425
      %v1427 = vand.u32 %v1037, 4294901760
      %1428 = vmatpush1.msra.mxu0 %v1427
      %v1429 = vand.u32 %v1040, 4294901760
      %1430 = vmatprep.subr.mxu0 %v1429
      %v1431 = vand.u32 %v1039, 4294901760
      %1432 = vmatpush1.msra.mxu0 %v1431
      %v1433 = vand.u32 %v1042, 4294901760
      %1434 = vmatprep.subr.mxu0 %v1433
      %v1435 = vand.u32 %v1041, 4294901760
      %1436 = vmatpush1.msra.mxu0 %v1435
      %v1437 = vand.u32 %v1044, 4294901760
      %1438 = vmatprep.subr.mxu0 %v1437
      %v1439 = vand.u32 %v1043, 4294901760
      %1440 = vmatpush1.msra.mxu0 %v1439
      %v1441 = vand.u32 %v1046, 4294901760
      %1442 = vmatprep.subr.mxu0 %v1441
      %v1443 = vand.u32 %v1045, 4294901760
      %1444 = vmatpush1.msra.mxu0 %v1443
      %v1445 = vand.u32 %v1048, 4294901760
      %1446 = vmatprep.subr.mxu0 %v1445
      %v1447 = vand.u32 %v1047, 4294901760
      %1448 = vmatpush1.msra.mxu0 %v1447
      %v1449 = vand.u32 %v1050, 4294901760
      %1450 = vmatprep.subr.mxu0 %v1449
      %v1451 = vand.u32 %v1049, 4294901760
      %1452 = vmatpush1.msra.mxu0 %v1451
      %v1453 = vand.u32 %v1052, 4294901760
      %1454 = vmatprep.subr.mxu0 %v1453
      %v1455 = vand.u32 %v1051, 4294901760
      %1456 = vmatpush1.msra.mxu0 %v1455
      %v1457 = vand.u32 %v1054, 4294901760
      %1458 = vmatprep.subr.mxu0 %v1457
      %v1459 = vand.u32 %v1053, 4294901760
      %1460 = vmatpush1.msra.mxu0 %v1459
      %1461 = vmatprep.subr.mxu0 0.0
      %1462 = vmatpush1.msra.mxu0 0.0
      %1463 = vmatprep.subr.mxu0 0.0
      %1464 = vmatpush1.msra.mxu0 0.0
      %1465 = vmatprep.subr.mxu0 0.0
      %1466 = vmatpush1.msra.mxu0 0.0
      %1467 = vmatprep.subr.mxu0 0.0
      %1468 = vmatpush1.msra.mxu0 0.0
      %1469 = vmatprep.subr.mxu0 0.0
      %1470 = vmatpush1.msra.mxu0 0.0
      %1471 = vmatprep.subr.mxu0 0.0
      %1472 = vmatpush1.msra.mxu0 0.0
      %1473 = vmatprep.subr.mxu0 0.0
      %1474 = vmatpush1.msra.mxu0 0.0
      %1475 = vmatprep.subr.mxu0 0.0
      %1476 = vmatpush1.msra.mxu0 0.0
      %1477 = vmatprep.subr.mxu0 0.0
      %1478 = vmatpush1.msra.mxu0 0.0
      %1479 = vmatprep.subr.mxu0 0.0
      %1480 = vmatpush1.msra.mxu0 0.0
      %1481 = vmatprep.subr.mxu0 0.0
      %1482 = vmatpush1.msra.mxu0 0.0
      %1483 = vmatprep.subr.mxu0 0.0
      %1484 = vmatpush1.msra.mxu0 0.0
      %1485 = vmatprep.subr.mxu0 0.0
      %1486 = vmatpush1.msra.mxu0 0.0
      %1487 = vmatprep.subr.mxu0 0.0
      %1488 = vmatpush1.msra.mxu0 0.0
      %1489 = vmatprep.subr.mxu0 0.0
      %1490 = vmatpush1.msra.mxu0 0.0
      %1491 = vmatprep.subr.mxu0 0.0
      %1492 = vmatpush1.msra.mxu0 0.0
      %1493 = vmatprep.subr.mxu0 0.0
      %1494 = vmatpush1.msra.mxu0 0.0
      %1495 = vmatprep.subr.mxu0 0.0
      %1496 = vmatpush1.msra.mxu0 0.0
      %1497 = vmatprep.subr.mxu0 0.0
      %1498 = vmatpush1.msra.mxu0 0.0
      %1499 = vmatprep.subr.mxu0 0.0
      %1500 = vmatpush1.msra.mxu0 0.0
      %1501 = vmatprep.subr.mxu0 0.0
      %1502 = vmatpush1.msra.mxu0 0.0
      %1503 = vmatprep.subr.mxu0 0.0
      %1504 = vmatpush1.msra.mxu0 0.0
      %1505 = vmatprep.subr.mxu0 0.0
      %1506 = vmatpush1.msra.mxu0 0.0
      %1507 = vmatprep.mubr.f32.mxu0 0.0
      %v1508 = vand.u32 %v1058, 4294901760
      %v1509 = vsub.f32 %v1058, %v1508
      %v1510 = vand.u32 %v1509, 4294901760
      %1511 = vmatmul.mubr.f32.gmra.mrb[0].mxu0 %v1510
      %v1512 = vpop.f32.mrb[0].mxu0
      %v1513 = vadd.f32 %v1421, %v1512
      %v1514 = vpop.f32.mrb[0].mxu0
      %v1515 = vadd.f32 %v1423, %v1514
      %1516 = vdwg.mxu0
      %v1517 = vand.u32 %v1038, 4294901760
      %v1518 = vsub.f32 %v1038, %v1517
      %v1519 = vand.u32 %v1518, 4294901760
      %1520 = vmatprep.subr.mxu0 %v1519
      %v1521 = vand.u32 %v1037, 4294901760
      %v1522 = vsub.f32 %v1037, %v1521
      %v1523 = vand.u32 %v1522, 4294901760
      %1524 = vmatpush1.msra.mxu0 %v1523
      %v1525 = vand.u32 %v1040, 4294901760
      %v1526 = vsub.f32 %v1040, %v1525
      %v1527 = vand.u32 %v1526, 4294901760
      %1528 = vmatprep.subr.mxu0 %v1527
      %v1529 = vand.u32 %v1039, 4294901760
      %v1530 = vsub.f32 %v1039, %v1529
      %v1531 = vand.u32 %v1530, 4294901760
      %1532 = vmatpush1.msra.mxu0 %v1531
      %v1533 = vand.u32 %v1042, 4294901760
      %v1534 = vsub.f32 %v1042, %v1533
      %v1535 = vand.u32 %v1534, 4294901760
      %1536 = vmatprep.subr.mxu0 %v1535
      %v1537 = vand.u32 %v1041, 4294901760
      %v1538 = vsub.f32 %v1041, %v1537
      %v1539 = vand.u32 %v1538, 4294901760
      %1540 = vmatpush1.msra.mxu0 %v1539
      %v1541 = vand.u32 %v1044, 4294901760
      %v1542 = vsub.f32 %v1044, %v1541
      %v1543 = vand.u32 %v1542, 4294901760
      %1544 = vmatprep.subr.mxu0 %v1543
      %v1545 = vand.u32 %v1043, 4294901760
      %v1546 = vsub.f32 %v1043, %v1545
      %v1547 = vand.u32 %v1546, 4294901760
      %1548 = vmatpush1.msra.mxu0 %v1547
      %v1549 = vand.u32 %v1046, 4294901760
      %v1550 = vsub.f32 %v1046, %v1549
      %v1551 = vand.u32 %v1550, 4294901760
      %1552 = vmatprep.subr.mxu0 %v1551
      %v1553 = vand.u32 %v1045, 4294901760
      %v1554 = vsub.f32 %v1045, %v1553
      %v1555 = vand.u32 %v1554, 4294901760
      %1556 = vmatpush1.msra.mxu0 %v1555
      %v1557 = vand.u32 %v1048, 4294901760
      %v1558 = vsub.f32 %v1048, %v1557
      %v1559 = vand.u32 %v1558, 4294901760
      %1560 = vmatprep.subr.mxu0 %v1559
      %v1561 = vand.u32 %v1047, 4294901760
      %v1562 = vsub.f32 %v1047, %v1561
      %v1563 = vand.u32 %v1562, 4294901760
      %1564 = vmatpush1.msra.mxu0 %v1563
      %v1565 = vand.u32 %v1050, 4294901760
      %v1566 = vsub.f32 %v1050, %v1565
      %v1567 = vand.u32 %v1566, 4294901760
      %1568 = vmatprep.subr.mxu0 %v1567
      %v1569 = vand.u32 %v1049, 4294901760
      %v1570 = vsub.f32 %v1049, %v1569
      %v1571 = vand.u32 %v1570, 4294901760
      %1572 = vmatpush1.msra.mxu0 %v1571
      %v1573 = vand.u32 %v1052, 4294901760
      %v1574 = vsub.f32 %v1052, %v1573
      %v1575 = vand.u32 %v1574, 4294901760
      %1576 = vmatprep.subr.mxu0 %v1575
      %v1577 = vand.u32 %v1051, 4294901760
      %v1578 = vsub.f32 %v1051, %v1577
      %v1579 = vand.u32 %v1578, 4294901760
      %1580 = vmatpush1.msra.mxu0 %v1579
      %v1581 = vand.u32 %v1054, 4294901760
      %v1582 = vsub.f32 %v1054, %v1581
      %v1583 = vand.u32 %v1582, 4294901760
      %1584 = vmatprep.subr.mxu0 %v1583
      %v1585 = vand.u32 %v1053, 4294901760
      %v1586 = vsub.f32 %v1053, %v1585
      %v1587 = vand.u32 %v1586, 4294901760
      %1588 = vmatpush1.msra.mxu0 %v1587
      %1589 = vmatprep.subr.mxu0 0.0
      %1590 = vmatpush1.msra.mxu0 0.0
      %1591 = vmatprep.subr.mxu0 0.0
      %1592 = vmatpush1.msra.mxu0 0.0
      %1593 = vmatprep.subr.mxu0 0.0
      %1594 = vmatpush1.msra.mxu0 0.0
      %1595 = vmatprep.subr.mxu0 0.0
      %1596 = vmatpush1.msra.mxu0 0.0
      %1597 = vmatprep.subr.mxu0 0.0
      %1598 = vmatpush1.msra.mxu0 0.0
      %1599 = vmatprep.subr.mxu0 0.0
      %1600 = vmatpush1.msra.mxu0 0.0
      %1601 = vmatprep.subr.mxu0 0.0
      %1602 = vmatpush1.msra.mxu0 0.0
      %1603 = vmatprep.subr.mxu0 0.0
      %1604 = vmatpush1.msra.mxu0 0.0
      %1605 = vmatprep.subr.mxu0 0.0
      %1606 = vmatpush1.msra.mxu0 0.0
      %1607 = vmatprep.subr.mxu0 0.0
      %1608 = vmatpush1.msra.mxu0 0.0
      %1609 = vmatprep.subr.mxu0 0.0
      %1610 = vmatpush1.msra.mxu0 0.0
      %1611 = vmatprep.subr.mxu0 0.0
      %1612 = vmatpush1.msra.mxu0 0.0
      %1613 = vmatprep.subr.mxu0 0.0
      %1614 = vmatpush1.msra.mxu0 0.0
      %1615 = vmatprep.subr.mxu0 0.0
      %1616 = vmatpush1.msra.mxu0 0.0
      %1617 = vmatprep.subr.mxu0 0.0
      %1618 = vmatpush1.msra.mxu0 0.0
      %1619 = vmatprep.subr.mxu0 0.0
      %1620 = vmatpush1.msra.mxu0 0.0
      %1621 = vmatprep.subr.mxu0 0.0
      %1622 = vmatpush1.msra.mxu0 0.0
      %1623 = vmatprep.subr.mxu0 0.0
      %1624 = vmatpush1.msra.mxu0 0.0
      %1625 = vmatprep.subr.mxu0 0.0
      %1626 = vmatpush1.msra.mxu0 0.0
      %1627 = vmatprep.subr.mxu0 0.0
      %1628 = vmatpush1.msra.mxu0 0.0
      %1629 = vmatprep.subr.mxu0 0.0
      %1630 = vmatpush1.msra.mxu0 0.0
      %1631 = vmatprep.subr.mxu0 0.0
      %1632 = vmatpush1.msra.mxu0 0.0
      %1633 = vmatprep.subr.mxu0 0.0
      %1634 = vmatpush1.msra.mxu0 0.0
      %1635 = vmatprep.mubr.f32.mxu0 0.0
      %v1636 = vand.u32 %v1058, 4294901760
      %1637 = vmatmul.mubr.f32.gmra.mrb[0].mxu0 %v1636
      %v1638 = vpop.f32.mrb[0].mxu0
      %v1639 = vadd.f32 %v1513, %v1638
      %v1640 = vpop.f32.mrb[0].mxu0
      %v1641 = vadd.f32 %v1515, %v1640
      %1642 = vdwg.mxu0
      %v1643 = vand.u32 %v1038, 4294901760
      %1644 = vmatprep.subr.mxu0 %v1643
      %v1645 = vand.u32 %v1037, 4294901760
      %1646 = vmatpush1.msra.mxu0 %v1645
      %v1647 = vand.u32 %v1040, 4294901760
      %1648 = vmatprep.subr.mxu0 %v1647
      %v1649 = vand.u32 %v1039, 4294901760
      %1650 = vmatpush1.msra.mxu0 %v1649
      %v1651 = vand.u32 %v1042, 4294901760
      %1652 = vmatprep.subr.mxu0 %v1651
      %v1653 = vand.u32 %v1041, 4294901760
      %1654 = vmatpush1.msra.mxu0 %v1653
      %v1655 = vand.u32 %v1044, 4294901760
      %1656 = vmatprep.subr.mxu0 %v1655
      %v1657 = vand.u32 %v1043, 4294901760
      %1658 = vmatpush1.msra.mxu0 %v1657
      %v1659 = vand.u32 %v1046, 4294901760
      %1660 = vmatprep.subr.mxu0 %v1659
      %v1661 = vand.u32 %v1045, 4294901760
      %1662 = vmatpush1.msra.mxu0 %v1661
      %v1663 = vand.u32 %v1048, 4294901760
      %1664 = vmatprep.subr.mxu0 %v1663
      %v1665 = vand.u32 %v1047, 4294901760
      %1666 = vmatpush1.msra.mxu0 %v1665
      %v1667 = vand.u32 %v1050, 4294901760
      %1668 = vmatprep.subr.mxu0 %v1667
      %v1669 = vand.u32 %v1049, 4294901760
      %1670 = vmatpush1.msra.mxu0 %v1669
      %v1671 = vand.u32 %v1052, 4294901760
      %1672 = vmatprep.subr.mxu0 %v1671
      %v1673 = vand.u32 %v1051, 4294901760
      %1674 = vmatpush1.msra.mxu0 %v1673
      %v1675 = vand.u32 %v1054, 4294901760
      %1676 = vmatprep.subr.mxu0 %v1675
      %v1677 = vand.u32 %v1053, 4294901760
      %1678 = vmatpush1.msra.mxu0 %v1677
      %1679 = vmatprep.subr.mxu0 0.0
      %1680 = vmatpush1.msra.mxu0 0.0
      %1681 = vmatprep.subr.mxu0 0.0
      %1682 = vmatpush1.msra.mxu0 0.0
      %1683 = vmatprep.subr.mxu0 0.0
      %1684 = vmatpush1.msra.mxu0 0.0
      %1685 = vmatprep.subr.mxu0 0.0
      %1686 = vmatpush1.msra.mxu0 0.0
      %1687 = vmatprep.subr.mxu0 0.0
      %1688 = vmatpush1.msra.mxu0 0.0
      %1689 = vmatprep.subr.mxu0 0.0
      %1690 = vmatpush1.msra.mxu0 0.0
      %1691 = vmatprep.subr.mxu0 0.0
      %1692 = vmatpush1.msra.mxu0 0.0
      %1693 = vmatprep.subr.mxu0 0.0
      %1694 = vmatpush1.msra.mxu0 0.0
      %1695 = vmatprep.subr.mxu0 0.0
      %1696 = vmatpush1.msra.mxu0 0.0
      %1697 = vmatprep.subr.mxu0 0.0
      %1698 = vmatpush1.msra.mxu0 0.0
      %1699 = vmatprep.subr.mxu0 0.0
      %1700 = vmatpush1.msra.mxu0 0.0
      %1701 = vmatprep.subr.mxu0 0.0
      %1702 = vmatpush1.msra.mxu0 0.0
      %1703 = vmatprep.subr.mxu0 0.0
      %1704 = vmatpush1.msra.mxu0 0.0
      %1705 = vmatprep.subr.mxu0 0.0
      %1706 = vmatpush1.msra.mxu0 0.0
      %1707 = vmatprep.subr.mxu0 0.0
      %1708 = vmatpush1.msra.mxu0 0.0
      %1709 = vmatprep.subr.mxu0 0.0
      %1710 = vmatpush1.msra.mxu0 0.0
      %1711 = vmatprep.subr.mxu0 0.0
      %1712 = vmatpush1.msra.mxu0 0.0
      %1713 = vmatprep.subr.mxu0 0.0
      %1714 = vmatpush1.msra.mxu0 0.0
      %1715 = vmatprep.subr.mxu0 0.0
      %1716 = vmatpush1.msra.mxu0 0.0
      %1717 = vmatprep.subr.mxu0 0.0
      %1718 = vmatpush1.msra.mxu0 0.0
      %1719 = vmatprep.subr.mxu0 0.0
      %1720 = vmatpush1.msra.mxu0 0.0
      %1721 = vmatprep.subr.mxu0 0.0
      %1722 = vmatpush1.msra.mxu0 0.0
      %1723 = vmatprep.subr.mxu0 0.0
      %1724 = vmatpush1.msra.mxu0 0.0
      %1725 = vmatprep.mubr.f32.mxu0 0.0
      %v1726 = vand.u32 %v1058, 4294901760
      %1727 = vmatmul.mubr.f32.gmra.mrb[0].mxu0 %v1726
      %v1728 = vpop.f32.mrb[0].mxu0
      %v1729 = vadd.f32 %v1639, %v1728
      %v1730 = vpop.f32.mrb[0].mxu0
      %v1731 = vadd.f32 %v1641, %v1730
      %1732 = vdwg.mxu0
      %v1733 = vmax.f32 %v1729, 0.0
      %v1734 = vmax.f32 %v1731, 0.0
      %v1735 = vsel %vm168, %v1733, 0.0
      %v1736 = vsel %vm169, %v1734, 0.0
      %v1737 = vsel %vm170, %v1733, 0.0
      %v1738 = vsel %vm171, %v1734, 0.0
      %1741 = vrot.lane.b32.xlu0 %v1735, 17
      %v1742 = vpop.permute.xlu0 %1741
      %1743 = vrot.lane.b32.xlu0 %v1736, 17
      %v1744 = vpop.permute.xlu0 %1743
      %v1745 = vsel %vm209, %v1742, %v1744
      %v1748 = vsel %vm209, 0.0, %v1742
      %1749 = vst [vmem:[#allocation2] sm:$0xff] %v1748
      %1750 = vst [vmem:[#allocation2 + $0x8] sm:$0xff] %v1745
      %1753 = vrot.lane.b32.xlu0 %v1733, 16
      %v1754 = vpop.permute.xlu0 %1753
      %1755 = vrot.lane.b32.xlu0 %v1734, 16
      %v1756 = vpop.permute.xlu0 %1755
      %v1757 = vsel %vm217, %v1754, %v1756
      %v1760 = vsel %vm217, 0.0, %v1754
      %1761 = vst [vmem:[#allocation2 + $0x10] sm:$0xff] %v1760
      %1762 = vst [vmem:[#allocation2 + $0x18] sm:$0xff] %v1757
      %1765 = vrot.lane.b32.xlu0 %v1737, 15
      %v1766 = vpop.permute.xlu0 %1765
      %1767 = vrot.lane.b32.xlu0 %v1738, 15
      %v1768 = vpop.permute.xlu0 %1767
      %v1769 = vsel %vm227, %v1766, %v1768
      %v1772 = vsel %vm227, 0.0, %v1766
      %1773 = vst [vmem:[#allocation2 + $0x20] sm:$0xff] %v1772
      %1774 = vst [vmem:[#allocation2 + $0x28] sm:$0xff] %v1769
      %1775 = vrot.lane.b32.xlu0 %v1735, 1
      %v1776 = vpop.permute.xlu0 %1775
      %1777 = vrot.lane.b32.xlu0 %v1736, 1
      %v1778 = vpop.permute.xlu0 %1777
      %v1779 = vsel %vm235, %v1776, %v1778
      %v1782 = vsel %vm235, 0.0, %v1776
      %1783 = vst [vmem:[#allocation2 + $0x30] sm:$0xff] %v1782
      %1784 = vst [vmem:[#allocation2 + $0x38] sm:$0xff] %v1779
      %1785 = vst [vmem:[#allocation2 + $0x40] sm:$0xff] %v1733
      %1786 = vst [vmem:[#allocation2 + $0x48] sm:$0xff] %v1734
      %1787 = vrot.lane.b32.xlu0 %v1737, 127
      %v1788 = vpop.permute.xlu0 %1787
      %1789 = vrot.lane.b32.xlu0 %v1738, 127
      %v1790 = vpop.permute.xlu0 %1789
      %v1791 = vsel %vm243, %v1788, %v1790
      %v1794 = vsel %vm243, %v1790, 0.0
      %1795 = vst [vmem:[#allocation2 + $0x50] sm:$0xff] %v1791
      %1796 = vst [vmem:[#allocation2 + $0x58] sm:$0xff] %v1794
      %1797 = vrot.lane.b32.xlu0 %v1735, 113
      %v1798 = vpop.permute.xlu0 %1797
      %1799 = vrot.lane.b32.xlu0 %v1736, 113
      %v1800 = vpop.permute.xlu0 %1799
      %v1801 = vsel %vm251, %v1798, %v1800
      %v1804 = vsel %vm251, %v1800, 0.0
      %1805 = vst [vmem:[#allocation2 + $0x60] sm:$0xff] %v1801
      %1806 = vst [vmem:[#allocation2 + $0x68] sm:$0xff] %v1804
      %1807 = vrot.lane.b32.xlu0 %v1733, 112
      %v1808 = vpop.permute.xlu0 %1807
      %1809 = vrot.lane.b32.xlu0 %v1734, 112
      %v1810 = vpop.permute.xlu0 %1809
      %v1811 = vsel %vm259, %v1808, %v1810
      %v1814 = vsel %vm259, %v1810, 0.0
      %1815 = vst [vmem:[#allocation2 + $0x70] sm:$0xff] %v1811
      %1816 = vst [vmem:[#allocation2 + $0x78] sm:$0xff] %v1814
      %1817 = vrot.lane.b32.xlu0 %v1737, 111
      %v1818 = vpop.permute.xlu0 %1817
      %1819 = vrot.lane.b32.xlu0 %v1738, 111
      %v1820 = vpop.permute.xlu0 %1819
      %v1821 = vsel %vm267, %v1818, %v1820
      %v1824 = vsel %vm267, %v1820, 0.0
      %1825 = vst [vmem:[#allocation2 + $0x80] sm:$0xff] %v1821
      %1826 = vst [vmem:[#allocation2 + $0x88] sm:$0xff] %v1824
      %v1827 = vld [vmem:[#allocation2] sm:$0xff]
      %v1828 = vld [vmem:[#allocation2 + $0x8] sm:$0xff]
      %v1829 = vld [vmem:[#allocation2 + $0x10] sm:$0xff]
      %v1830 = vld [vmem:[#allocation2 + $0x18] sm:$0xff]
      %v1831 = vld [vmem:[#allocation2 + $0x20] sm:$0xff]
      %v1832 = vld [vmem:[#allocation2 + $0x28] sm:$0xff]
      %v1833 = vld [vmem:[#allocation2 + $0x30] sm:$0xff]
      %v1834 = vld [vmem:[#allocation2 + $0x38] sm:$0xff]
      %v1835 = vld [vmem:[#allocation2 + $0x40] sm:$0xff]
      %v1836 = vld [vmem:[#allocation2 + $0x48] sm:$0xff]
      %v1837 = vld [vmem:[#allocation2 + $0x50] sm:$0xff]
      %v1838 = vld [vmem:[#allocation2 + $0x58] sm:$0xff]
      %v1839 = vld [vmem:[#allocation2 + $0x60] sm:$0xff]
      %v1840 = vld [vmem:[#allocation2 + $0x68] sm:$0xff]
      %v1841 = vld [vmem:[#allocation2 + $0x70] sm:$0xff]
      %v1842 = vld [vmem:[#allocation2 + $0x78] sm:$0xff]
      %v1843 = vld [vmem:[#allocation2 + $0x80] sm:$0xff]
      %v1844 = vld [vmem:[#allocation2 + $0x88] sm:$0xff]
      %1845 = vrot.lane.b32.xlu0 %v172, 47
      %v1846 = vpop.permute.xlu0 %1845
      %1847 = vrot.lane.b32.xlu0 %v173, 47
      %v1848 = vpop.permute.xlu0 %1847
      %vm1849 = vcmask 384000
      %v1850 = vsel %vm1849, %v1846, %v1848
      %v1851 = vsel %vm1057, %v1850, 0
      %v1853 = vand.u32 %v1828, 4294901760
      %1854 = vmatprep.subr.mxu0 %v1853
      %v1855 = vand.u32 %v1827, 4294901760
      %1856 = vmatpush1.msra.mxu0 %v1855
      %v1857 = vand.u32 %v1830, 4294901760
      %1858 = vmatprep.subr.mxu0 %v1857
      %v1859 = vand.u32 %v1829, 4294901760
      %1860 = vmatpush1.msra.mxu0 %v1859
      %v1861 = vand.u32 %v1832, 4294901760
      %1862 = vmatprep.subr.mxu0 %v1861
      %v1863 = vand.u32 %v1831, 4294901760
      %1864 = vmatpush1.msra.mxu0 %v1863
      %v1865 = vand.u32 %v1834, 4294901760
      %1866 = vmatprep.subr.mxu0 %v1865
      %v1867 = vand.u32 %v1833, 4294901760
      %1868 = vmatpush1.msra.mxu0 %v1867
      %v1869 = vand.u32 %v1836, 4294901760
      %1870 = vmatprep.subr.mxu0 %v1869
      %v1871 = vand.u32 %v1835, 4294901760
      %1872 = vmatpush1.msra.mxu0 %v1871
      %v1873 = vand.u32 %v1838, 4294901760
      %1874 = vmatprep.subr.mxu0 %v1873
      %v1875 = vand.u32 %v1837, 4294901760
      %1876 = vmatpush1.msra.mxu0 %v1875
      %v1877 = vand.u32 %v1840, 4294901760
      %1878 = vmatprep.subr.mxu0 %v1877
      %v1879 = vand.u32 %v1839, 4294901760
      %1880 = vmatpush1.msra.mxu0 %v1879
      %v1881 = vand.u32 %v1842, 4294901760
      %1882 = vmatprep.subr.mxu0 %v1881
      %v1883 = vand.u32 %v1841, 4294901760
      %1884 = vmatpush1.msra.mxu0 %v1883
      %v1885 = vand.u32 %v1844, 4294901760
      %1886 = vmatprep.subr.mxu0 %v1885
      %v1887 = vand.u32 %v1843, 4294901760
      %1888 = vmatpush1.msra.mxu0 %v1887
      %1889 = vmatprep.subr.mxu0 0.0
      %1890 = vmatpush1.msra.mxu0 0.0
      %1891 = vmatprep.subr.mxu0 0.0
      %1892 = vmatpush1.msra.mxu0 0.0
      %1893 = vmatprep.subr.mxu0 0.0
      %1894 = vmatpush1.msra.mxu0 0.0
      %1895 = vmatprep.subr.mxu0 0.0
      %1896 = vmatpush1.msra.mxu0 0.0
      %1897 = vmatprep.subr.mxu0 0.0
      %1898 = vmatpush1.msra.mxu0 0.0
      %1899 = vmatprep.subr.mxu0 0.0
      %1900 = vmatpush1.msra.mxu0 0.0
      %1901 = vmatprep.subr.mxu0 0.0
      %1902 = vmatpush1.msra.mxu0 0.0
      %1903 = vmatprep.subr.mxu0 0.0
      %1904 = vmatpush1.msra.mxu0 0.0
      %1905 = vmatprep.subr.mxu0 0.0
      %1906 = vmatpush1.msra.mxu0 0.0
      %1907 = vmatprep.subr.mxu0 0.0
      %1908 = vmatpush1.msra.mxu0 0.0
      %1909 = vmatprep.subr.mxu0 0.0
      %1910 = vmatpush1.msra.mxu0 0.0
      %1911 = vmatprep.subr.mxu0 0.0
      %1912 = vmatpush1.msra.mxu0 0.0
      %1913 = vmatprep.subr.mxu0 0.0
      %1914 = vmatpush1.msra.mxu0 0.0
      %1915 = vmatprep.subr.mxu0 0.0
      %1916 = vmatpush1.msra.mxu0 0.0
      %1917 = vmatprep.subr.mxu0 0.0
      %1918 = vmatpush1.msra.mxu0 0.0
      %1919 = vmatprep.subr.mxu0 0.0
      %1920 = vmatpush1.msra.mxu0 0.0
      %1921 = vmatprep.subr.mxu0 0.0
      %1922 = vmatpush1.msra.mxu0 0.0
      %1923 = vmatprep.subr.mxu0 0.0
      %1924 = vmatpush1.msra.mxu0 0.0
      %1925 = vmatprep.subr.mxu0 0.0
      %1926 = vmatpush1.msra.mxu0 0.0
      %1927 = vmatprep.subr.mxu0 0.0
      %1928 = vmatpush1.msra.mxu0 0.0
      %1929 = vmatprep.subr.mxu0 0.0
      %1930 = vmatpush1.msra.mxu0 0.0
      %1931 = vmatprep.subr.mxu0 0.0
      %1932 = vmatpush1.msra.mxu0 0.0
      %1933 = vmatprep.subr.mxu0 0.0
      %1934 = vmatpush1.msra.mxu0 0.0
      %1935 = vmatprep.mubr.f32.mxu0 0.0
      %v1936 = vand.u32 %v1851, 4294901760
      %v1937 = vsub.f32 %v1851, %v1936
      %v1938 = vand.u32 %v1937, 4294901760
      %v1939 = vsub.f32 %v1937, %v1938
      %v1940 = vand.u32 %v1939, 4294901760
      %1941 = vmatmul.mubr.f32.gmra.mrb[0].mxu0 %v1940
      %v1942 = vpop.f32.mrb[0].mxu0
      %v1943 = vadd.f32 %v185, %v1942
      %v1944 = vpop.f32.mrb[0].mxu0
      %v1945 = vadd.f32 %v185, %v1944
      %1946 = vdwg.mxu0
      %v1947 = vand.u32 %v1828, 4294901760
      %v1948 = vsub.f32 %v1828, %v1947
      %v1949 = vand.u32 %v1948, 4294901760
      %v1950 = vsub.f32 %v1948, %v1949
      %v1951 = vand.u32 %v1950, 4294901760
      %1952 = vmatprep.subr.mxu0 %v1951
      %v1953 = vand.u32 %v1827, 4294901760
      %v1954 = vsub.f32 %v1827, %v1953
      %v1955 = vand.u32 %v1954, 4294901760
      %v1956 = vsub.f32 %v1954, %v1955
      %v1957 = vand.u32 %v1956, 4294901760
      %1958 = vmatpush1.msra.mxu0 %v1957
      %v1959 = vand.u32 %v1830, 4294901760
      %v1960 = vsub.f32 %v1830, %v1959
      %v1961 = vand.u32 %v1960, 4294901760
      %v1962 = vsub.f32 %v1960, %v1961
      %v1963 = vand.u32 %v1962, 4294901760
      %1964 = vmatprep.subr.mxu0 %v1963
      %v1965 = vand.u32 %v1829, 4294901760
      %v1966 = vsub.f32 %v1829, %v1965
      %v1967 = vand.u32 %v1966, 4294901760
      %v1968 = vsub.f32 %v1966, %v1967
      %v1969 = vand.u32 %v1968, 4294901760
      %1970 = vmatpush1.msra.mxu0 %v1969
      %v1971 = vand.u32 %v1832, 4294901760
      %v1972 = vsub.f32 %v1832, %v1971
      %v1973 = vand.u32 %v1972, 4294901760
      %v1974 = vsub.f32 %v1972, %v1973
      %v1975 = vand.u32 %v1974, 4294901760
      %1976 = vmatprep.subr.mxu0 %v1975
      %v1977 = vand.u32 %v1831, 4294901760
      %v1978 = vsub.f32 %v1831, %v1977
      %v1979 = vand.u32 %v1978, 4294901760
      %v1980 = vsub.f32 %v1978, %v1979
      %v1981 = vand.u32 %v1980, 4294901760
      %1982 = vmatpush1.msra.mxu0 %v1981
      %v1983 = vand.u32 %v1834, 4294901760
      %v1984 = vsub.f32 %v1834, %v1983
      %v1985 = vand.u32 %v1984, 4294901760
      %v1986 = vsub.f32 %v1984, %v1985
      %v1987 = vand.u32 %v1986, 4294901760
      %1988 = vmatprep.subr.mxu0 %v1987
      %v1989 = vand.u32 %v1833, 4294901760
      %v1990 = vsub.f32 %v1833, %v1989
      %v1991 = vand.u32 %v1990, 4294901760
      %v1992 = vsub.f32 %v1990, %v1991
      %v1993 = vand.u32 %v1992, 4294901760
      %1994 = vmatpush1.msra.mxu0 %v1993
      %v1995 = vand.u32 %v1836, 4294901760
      %v1996 = vsub.f32 %v1836, %v1995
      %v1997 = vand.u32 %v1996, 4294901760
      %v1998 = vsub.f32 %v1996, %v1997
      %v1999 = vand.u32 %v1998, 4294901760
      %2000 = vmatprep.subr.mxu0 %v1999
      %v2001 = vand.u32 %v1835, 4294901760
      %v2002 = vsub.f32 %v1835, %v2001
      %v2003 = vand.u32 %v2002, 4294901760
      %v2004 = vsub.f32 %v2002, %v2003
      %v2005 = vand.u32 %v2004, 4294901760
      %2006 = vmatpush1.msra.mxu0 %v2005
      %v2007 = vand.u32 %v1838, 4294901760
      %v2008 = vsub.f32 %v1838, %v2007
      %v2009 = vand.u32 %v2008, 4294901760
      %v2010 = vsub.f32 %v2008, %v2009
      %v2011 = vand.u32 %v2010, 4294901760
      %2012 = vmatprep.subr.mxu0 %v2011
      %v2013 = vand.u32 %v1837, 4294901760
      %v2014 = vsub.f32 %v1837, %v2013
      %v2015 = vand.u32 %v2014, 4294901760
      %v2016 = vsub.f32 %v2014, %v2015
      %v2017 = vand.u32 %v2016, 4294901760
      %2018 = vmatpush1.msra.mxu0 %v2017
      %v2019 = vand.u32 %v1840, 4294901760
      %v2020 = vsub.f32 %v1840, %v2019
      %v2021 = vand.u32 %v2020, 4294901760
      %v2022 = vsub.f32 %v2020, %v2021
      %v2023 = vand.u32 %v2022, 4294901760
      %2024 = vmatprep.subr.mxu0 %v2023
      %v2025 = vand.u32 %v1839, 4294901760
      %v2026 = vsub.f32 %v1839, %v2025
      %v2027 = vand.u32 %v2026, 4294901760
      %v2028 = vsub.f32 %v2026, %v2027
      %v2029 = vand.u32 %v2028, 4294901760
      %2030 = vmatpush1.msra.mxu0 %v2029
      %v2031 = vand.u32 %v1842, 4294901760
      %v2032 = vsub.f32 %v1842, %v2031
      %v2033 = vand.u32 %v2032, 4294901760
      %v2034 = vsub.f32 %v2032, %v2033
      %v2035 = vand.u32 %v2034, 4294901760
      %2036 = vmatprep.subr.mxu0 %v2035
      %v2037 = vand.u32 %v1841, 4294901760
      %v2038 = vsub.f32 %v1841, %v2037
      %v2039 = vand.u32 %v2038, 4294901760
      %v2040 = vsub.f32 %v2038, %v2039
      %v2041 = vand.u32 %v2040, 4294901760
      %2042 = vmatpush1.msra.mxu0 %v2041
      %v2043 = vand.u32 %v1844, 4294901760
      %v2044 = vsub.f32 %v1844, %v2043
      %v2045 = vand.u32 %v2044, 4294901760
      %v2046 = vsub.f32 %v2044, %v2045
      %v2047 = vand.u32 %v2046, 4294901760
      %2048 = vmatprep.subr.mxu0 %v2047
      %v2049 = vand.u32 %v1843, 4294901760
      %v2050 = vsub.f32 %v1843, %v2049
      %v2051 = vand.u32 %v2050, 4294901760
      %v2052 = vsub.f32 %v2050, %v2051
      %v2053 = vand.u32 %v2052, 4294901760
      %2054 = vmatpush1.msra.mxu0 %v2053
      %2055 = vmatprep.subr.mxu0 0.0
      %2056 = vmatpush1.msra.mxu0 0.0
      %2057 = vmatprep.subr.mxu0 0.0
      %2058 = vmatpush1.msra.mxu0 0.0
      %2059 = vmatprep.subr.mxu0 0.0
      %2060 = vmatpush1.msra.mxu0 0.0
      %2061 = vmatprep.subr.mxu0 0.0
      %2062 = vmatpush1.msra.mxu0 0.0
      %2063 = vmatprep.subr.mxu0 0.0
      %2064 = vmatpush1.msra.mxu0 0.0
      %2065 = vmatprep.subr.mxu0 0.0
      %2066 = vmatpush1.msra.mxu0 0.0
      %2067 = vmatprep.subr.mxu0 0.0
      %2068 = vmatpush1.msra.mxu0 0.0
      %2069 = vmatprep.subr.mxu0 0.0
      %2070 = vmatpush1.msra.mxu0 0.0
      %2071 = vmatprep.subr.mxu0 0.0
      %2072 = vmatpush1.msra.mxu0 0.0
      %2073 = vmatprep.subr.mxu0 0.0
      %2074 = vmatpush1.msra.mxu0 0.0
      %2075 = vmatprep.subr.mxu0 0.0
      %2076 = vmatpush1.msra.mxu0 0.0
      %2077 = vmatprep.subr.mxu0 0.0
      %2078 = vmatpush1.msra.mxu0 0.0
      %2079 = vmatprep.subr.mxu0 0.0
      %2080 = vmatpush1.msra.mxu0 0.0
      %2081 = vmatprep.subr.mxu0 0.0
      %2082 = vmatpush1.msra.mxu0 0.0
      %2083 = vmatprep.subr.mxu0 0.0
      %2084 = vmatpush1.msra.mxu0 0.0
      %2085 = vmatprep.subr.mxu0 0.0
      %2086 = vmatpush1.msra.mxu0 0.0
      %2087 = vmatprep.subr.mxu0 0.0
      %2088 = vmatpush1.msra.mxu0 0.0
      %2089 = vmatprep.subr.mxu0 0.0
      %2090 = vmatpush1.msra.mxu0 0.0
      %2091 = vmatprep.subr.mxu0 0.0
      %2092 = vmatpush1.msra.mxu0 0.0
      %2093 = vmatprep.subr.mxu0 0.0
      %2094 = vmatpush1.msra.mxu0 0.0
      %2095 = vmatprep.subr.mxu0 0.0
      %2096 = vmatpush1.msra.mxu0 0.0
      %2097 = vmatprep.subr.mxu0 0.0
      %2098 = vmatpush1.msra.mxu0 0.0
      %2099 = vmatprep.subr.mxu0 0.0
      %2100 = vmatpush1.msra.mxu0 0.0
      %2101 = vmatprep.mubr.f32.mxu0 0.0
      %v2102 = vand.u32 %v1851, 4294901760
      %2103 = vmatmul.mubr.f32.gmra.mrb[0].mxu0 %v2102
      %v2104 = vpop.f32.mrb[0].mxu0
      %v2105 = vadd.f32 %v1943, %v2104
      %v2106 = vpop.f32.mrb[0].mxu0
      %v2107 = vadd.f32 %v1945, %v2106
      %2108 = vdwg.mxu0
      %v2109 = vand.u32 %v1828, 4294901760
      %v2110 = vsub.f32 %v1828, %v2109
      %2111 = vmatprep.subr.mxu0 %v2110
      %v2112 = vand.u32 %v1827, 4294901760
      %v2113 = vsub.f32 %v1827, %v2112
      %2114 = vmatpush1.msra.mxu0 %v2113
      %v2115 = vand.u32 %v1830, 4294901760
      %v2116 = vsub.f32 %v1830, %v2115
      %2117 = vmatprep.subr.mxu0 %v2116
      %v2118 = vand.u32 %v1829, 4294901760
      %v2119 = vsub.f32 %v1829, %v2118
      %2120 = vmatpush1.msra.mxu0 %v2119
      %v2121 = vand.u32 %v1832, 4294901760
      %v2122 = vsub.f32 %v1832, %v2121
      %2123 = vmatprep.subr.mxu0 %v2122
      %v2124 = vand.u32 %v1831, 4294901760
      %v2125 = vsub.f32 %v1831, %v2124
      %2126 = vmatpush1.msra.mxu0 %v2125
      %v2127 = vand.u32 %v1834, 4294901760
      %v2128 = vsub.f32 %v1834, %v2127
      %2129 = vmatprep.subr.mxu0 %v2128
      %v2130 = vand.u32 %v1833, 4294901760
      %v2131 = vsub.f32 %v1833, %v2130
      %2132 = vmatpush1.msra.mxu0 %v2131
      %v2133 = vand.u32 %v1836, 4294901760
      %v2134 = vsub.f32 %v1836, %v2133
      %2135 = vmatprep.subr.mxu0 %v2134
      %v2136 = vand.u32 %v1835, 4294901760
      %v2137 = vsub.f32 %v1835, %v2136
      %2138 = vmatpush1.msra.mxu0 %v2137
      %v2139 = vand.u32 %v1838, 4294901760
      %v2140 = vsub.f32 %v1838, %v2139
      %2141 = vmatprep.subr.mxu0 %v2140
      %v2142 = vand.u32 %v1837, 4294901760
      %v2143 = vsub.f32 %v1837, %v2142
      %2144 = vmatpush1.msra.mxu0 %v2143
      %v2145 = vand.u32 %v1840, 4294901760
      %v2146 = vsub.f32 %v1840, %v2145
      %2147 = vmatprep.subr.mxu0 %v2146
      %v2148 = vand.u32 %v1839, 4294901760
      %v2149 = vsub.f32 %v1839, %v2148
      %2150 = vmatpush1.msra.mxu0 %v2149
      %v2151 = vand.u32 %v1842, 4294901760
      %v2152 = vsub.f32 %v1842, %v2151
      %2153 = vmatprep.subr.mxu0 %v2152
      %v2154 = vand.u32 %v1841, 4294901760
      %v2155 = vsub.f32 %v1841, %v2154
      %2156 = vmatpush1.msra.mxu0 %v2155
      %v2157 = vand.u32 %v1844, 4294901760
      %v2158 = vsub.f32 %v1844, %v2157
      %2159 = vmatprep.subr.mxu0 %v2158
      %v2160 = vand.u32 %v1843, 4294901760
      %v2161 = vsub.f32 %v1843, %v2160
      %2162 = vmatpush1.msra.mxu0 %v2161
      %2163 = vmatprep.subr.mxu0 0.0
      %2164 = vmatpush1.msra.mxu0 0.0
      %2165 = vmatprep.subr.mxu0 0.0
      %2166 = vmatpush1.msra.mxu0 0.0
      %2167 = vmatprep.subr.mxu0 0.0
      %2168 = vmatpush1.msra.mxu0 0.0
      %2169 = vmatprep.subr.mxu0 0.0
      %2170 = vmatpush1.msra.mxu0 0.0
      %2171 = vmatprep.subr.mxu0 0.0
      %2172 = vmatpush1.msra.mxu0 0.0
      %2173 = vmatprep.subr.mxu0 0.0
      %2174 = vmatpush1.msra.mxu0 0.0
      %2175 = vmatprep.subr.mxu0 0.0
      %2176 = vmatpush1.msra.mxu0 0.0
      %2177 = vmatprep.subr.mxu0 0.0
      %2178 = vmatpush1.msra.mxu0 0.0
      %2179 = vmatprep.subr.mxu0 0.0
      %2180 = vmatpush1.msra.mxu0 0.0
      %2181 = vmatprep.subr.mxu0 0.0
      %2182 = vmatpush1.msra.mxu0 0.0
      %2183 = vmatprep.subr.mxu0 0.0
      %2184 = vmatpush1.msra.mxu0 0.0
      %2185 = vmatprep.subr.mxu0 0.0
      %2186 = vmatpush1.msra.mxu0 0.0
      %2187 = vmatprep.subr.mxu0 0.0
      %2188 = vmatpush1.msra.mxu0 0.0
      %2189 = vmatprep.subr.mxu0 0.0
      %2190 = vmatpush1.msra.mxu0 0.0
      %2191 = vmatprep.subr.mxu0 0.0
      %2192 = vmatpush1.msra.mxu0 0.0
      %2193 = vmatprep.subr.mxu0 0.0
      %2194 = vmatpush1.msra.mxu0 0.0
      %2195 = vmatprep.subr.mxu0 0.0
      %2196 = vmatpush1.msra.mxu0 0.0
      %2197 = vmatprep.subr.mxu0 0.0
      %2198 = vmatpush1.msra.mxu0 0.0
      %2199 = vmatprep.subr.mxu0 0.0
      %2200 = vmatpush1.msra.mxu0 0.0
      %2201 = vmatprep.subr.mxu0 0.0
      %2202 = vmatpush1.msra.mxu0 0.0
      %2203 = vmatprep.subr.mxu0 0.0
      %2204 = vmatpush1.msra.mxu0 0.0
      %2205 = vmatprep.subr.mxu0 0.0
      %2206 = vmatpush1.msra.mxu0 0.0
      %2207 = vmatprep.subr.mxu0 0.0
      %2208 = vmatpush1.msra.mxu0 0.0
      %2209 = vmatprep.mubr.f32.mxu0 0.0
      %v2210 = vand.u32 %v1851, 4294901760
      %v2211 = vsub.f32 %v1851, %v2210
      %2212 = vmatmul.mubr.f32.gmra.mrb[0].mxu0 %v2211
      %v2213 = vpop.f32.mrb[0].mxu0
      %v2214 = vadd.f32 %v2105, %v2213
      %v2215 = vpop.f32.mrb[0].mxu0
      %v2216 = vadd.f32 %v2107, %v2215
      %2217 = vdwg.mxu0
      %v2218 = vand.u32 %v1828, 4294901760
      %2219 = vmatprep.subr.mxu0 %v2218
      %v2220 = vand.u32 %v1827, 4294901760
      %2221 = vmatpush1.msra.mxu0 %v2220
      %v2222 = vand.u32 %v1830, 4294901760
      %2223 = vmatprep.subr.mxu0 %v2222
      %v2224 = vand.u32 %v1829, 4294901760
      %2225 = vmatpush1.msra.mxu0 %v2224
      %v2226 = vand.u32 %v1832, 4294901760
      %2227 = vmatprep.subr.mxu0 %v2226
      %v2228 = vand.u32 %v1831, 4294901760
      %2229 = vmatpush1.msra.mxu0 %v2228
      %v2230 = vand.u32 %v1834, 4294901760
      %2231 = vmatprep.subr.mxu0 %v2230
      %v2232 = vand.u32 %v1833, 4294901760
      %2233 = vmatpush1.msra.mxu0 %v2232
      %v2234 = vand.u32 %v1836, 4294901760
      %2235 = vmatprep.subr.mxu0 %v2234
      %v2236 = vand.u32 %v1835, 4294901760
      %2237 = vmatpush1.msra.mxu0 %v2236
      %v2238 = vand.u32 %v1838, 4294901760
      %2239 = vmatprep.subr.mxu0 %v2238
      %v2240 = vand.u32 %v1837, 4294901760
      %2241 = vmatpush1.msra.mxu0 %v2240
      %v2242 = vand.u32 %v1840, 4294901760
      %2243 = vmatprep.subr.mxu0 %v2242
      %v2244 = vand.u32 %v1839, 4294901760
      %2245 = vmatpush1.msra.mxu0 %v2244
      %v2246 = vand.u32 %v1842, 4294901760
      %2247 = vmatprep.subr.mxu0 %v2246
      %v2248 = vand.u32 %v1841, 4294901760
      %2249 = vmatpush1.msra.mxu0 %v2248
      %v2250 = vand.u32 %v1844, 4294901760
      %2251 = vmatprep.subr.mxu0 %v2250
      %v2252 = vand.u32 %v1843, 4294901760
      %2253 = vmatpush1.msra.mxu0 %v2252
      %2254 = vmatprep.subr.mxu0 0.0
      %2255 = vmatpush1.msra.mxu0 0.0
      %2256 = vmatprep.subr.mxu0 0.0
      %2257 = vmatpush1.msra.mxu0 0.0
      %2258 = vmatprep.subr.mxu0 0.0
      %2259 = vmatpush1.msra.mxu0 0.0
      %2260 = vmatprep.subr.mxu0 0.0
      %2261 = vmatpush1.msra.mxu0 0.0
      %2262 = vmatprep.subr.mxu0 0.0
      %2263 = vmatpush1.msra.mxu0 0.0
      %2264 = vmatprep.subr.mxu0 0.0
      %2265 = vmatpush1.msra.mxu0 0.0
      %2266 = vmatprep.subr.mxu0 0.0
      %2267 = vmatpush1.msra.mxu0 0.0
      %2268 = vmatprep.subr.mxu0 0.0
      %2269 = vmatpush1.msra.mxu0 0.0
      %2270 = vmatprep.subr.mxu0 0.0
      %2271 = vmatpush1.msra.mxu0 0.0
      %2272 = vmatprep.subr.mxu0 0.0
      %2273 = vmatpush1.msra.mxu0 0.0
      %2274 = vmatprep.subr.mxu0 0.0
      %2275 = vmatpush1.msra.mxu0 0.0
      %2276 = vmatprep.subr.mxu0 0.0
      %2277 = vmatpush1.msra.mxu0 0.0
      %2278 = vmatprep.subr.mxu0 0.0
      %2279 = vmatpush1.msra.mxu0 0.0
      %2280 = vmatprep.subr.mxu0 0.0
      %2281 = vmatpush1.msra.mxu0 0.0
      %2282 = vmatprep.subr.mxu0 0.0
      %2283 = vmatpush1.msra.mxu0 0.0
      %2284 = vmatprep.subr.mxu0 0.0
      %2285 = vmatpush1.msra.mxu0 0.0
      %2286 = vmatprep.subr.mxu0 0.0
      %2287 = vmatpush1.msra.mxu0 0.0
      %2288 = vmatprep.subr.mxu0 0.0
      %2289 = vmatpush1.msra.mxu0 0.0
      %2290 = vmatprep.subr.mxu0 0.0
      %2291 = vmatpush1.msra.mxu0 0.0
      %2292 = vmatprep.subr.mxu0 0.0
      %2293 = vmatpush1.msra.mxu0 0.0
      %2294 = vmatprep.subr.mxu0 0.0
      %2295 = vmatpush1.msra.mxu0 0.0
      %2296 = vmatprep.subr.mxu0 0.0
      %2297 = vmatpush1.msra.mxu0 0.0
      %2298 = vmatprep.subr.mxu0 0.0
      %2299 = vmatpush1.msra.mxu0 0.0
      %2300 = vmatprep.mubr.f32.mxu0 0.0
      %v2301 = vand.u32 %v1851, 4294901760
      %v2302 = vsub.f32 %v1851, %v2301
      %v2303 = vand.u32 %v2302, 4294901760
      %2304 = vmatmul.mubr.f32.gmra.mrb[0].mxu0 %v2303
      %v2305 = vpop.f32.mrb[0].mxu0
      %v2306 = vadd.f32 %v2214, %v2305
      %v2307 = vpop.f32.mrb[0].mxu0
      %v2308 = vadd.f32 %v2216, %v2307
      %2309 = vdwg.mxu0
      %v2310 = vand.u32 %v1828, 4294901760
      %v2311 = vsub.f32 %v1828, %v2310
      %v2312 = vand.u32 %v2311, 4294901760
      %2313 = vmatprep.subr.mxu0 %v2312
      %v2314 = vand.u32 %v1827, 4294901760
      %v2315 = vsub.f32 %v1827, %v2314
      %v2316 = vand.u32 %v2315, 4294901760
      %2317 = vmatpush1.msra.mxu0 %v2316
      %v2318 = vand.u32 %v1830, 4294901760
      %v2319 = vsub.f32 %v1830, %v2318
      %v2320 = vand.u32 %v2319, 4294901760
      %2321 = vmatprep.subr.mxu0 %v2320
      %v2322 = vand.u32 %v1829, 4294901760
      %v2323 = vsub.f32 %v1829, %v2322
      %v2324 = vand.u32 %v2323, 4294901760
      %2325 = vmatpush1.msra.mxu0 %v2324
      %v2326 = vand.u32 %v1832, 4294901760
      %v2327 = vsub.f32 %v1832, %v2326
      %v2328 = vand.u32 %v2327, 4294901760
      %2329 = vmatprep.subr.mxu0 %v2328
      %v2330 = vand.u32 %v1831, 4294901760
      %v2331 = vsub.f32 %v1831, %v2330
      %v2332 = vand.u32 %v2331, 4294901760
      %2333 = vmatpush1.msra.mxu0 %v2332
      %v2334 = vand.u32 %v1834, 4294901760
      %v2335 = vsub.f32 %v1834, %v2334
      %v2336 = vand.u32 %v2335, 4294901760
      %2337 = vmatprep.subr.mxu0 %v2336
      %v2338 = vand.u32 %v1833, 4294901760
      %v2339 = vsub.f32 %v1833, %v2338
      %v2340 = vand.u32 %v2339, 4294901760
      %2341 = vmatpush1.msra.mxu0 %v2340
      %v2342 = vand.u32 %v1836, 4294901760
      %v2343 = vsub.f32 %v1836, %v2342
      %v2344 = vand.u32 %v2343, 4294901760
      %2345 = vmatprep.subr.mxu0 %v2344
      %v2346 = vand.u32 %v1835, 4294901760
      %v2347 = vsub.f32 %v1835, %v2346
      %v2348 = vand.u32 %v2347, 4294901760
      %2349 = vmatpush1.msra.mxu0 %v2348
      %v2350 = vand.u32 %v1838, 4294901760
      %v2351 = vsub.f32 %v1838, %v2350
      %v2352 = vand.u32 %v2351, 4294901760
      %2353 = vmatprep.subr.mxu0 %v2352
      %v2354 = vand.u32 %v1837, 4294901760
      %v2355 = vsub.f32 %v1837, %v2354
      %v2356 = vand.u32 %v2355, 4294901760
      %2357 = vmatpush1.msra.mxu0 %v2356
      %v2358 = vand.u32 %v1840, 4294901760
      %v2359 = vsub.f32 %v1840, %v2358
      %v2360 = vand.u32 %v2359, 4294901760
      %2361 = vmatprep.subr.mxu0 %v2360
      %v2362 = vand.u32 %v1839, 4294901760
      %v2363 = vsub.f32 %v1839, %v2362
      %v2364 = vand.u32 %v2363, 4294901760
      %2365 = vmatpush1.msra.mxu0 %v2364
      %v2366 = vand.u32 %v1842, 4294901760
      %v2367 = vsub.f32 %v1842, %v2366
      %v2368 = vand.u32 %v2367, 4294901760
      %2369 = vmatprep.subr.mxu0 %v2368
      %v2370 = vand.u32 %v1841, 4294901760
      %v2371 = vsub.f32 %v1841, %v2370
      %v2372 = vand.u32 %v2371, 4294901760
      %2373 = vmatpush1.msra.mxu0 %v2372
      %v2374 = vand.u32 %v1844, 4294901760
      %v2375 = vsub.f32 %v1844, %v2374
      %v2376 = vand.u32 %v2375, 4294901760
      %2377 = vmatprep.subr.mxu0 %v2376
      %v2378 = vand.u32 %v1843, 4294901760
      %v2379 = vsub.f32 %v1843, %v2378
      %v2380 = vand.u32 %v2379, 4294901760
      %2381 = vmatpush1.msra.mxu0 %v2380
      %2382 = vmatprep.subr.mxu0 0.0
      %2383 = vmatpush1.msra.mxu0 0.0
      %2384 = vmatprep.subr.mxu0 0.0
      %2385 = vmatpush1.msra.mxu0 0.0
      %2386 = vmatprep.subr.mxu0 0.0
      %2387 = vmatpush1.msra.mxu0 0.0
      %2388 = vmatprep.subr.mxu0 0.0
      %2389 = vmatpush1.msra.mxu0 0.0
      %2390 = vmatprep.subr.mxu0 0.0
      %2391 = vmatpush1.msra.mxu0 0.0
      %2392 = vmatprep.subr.mxu0 0.0
      %2393 = vmatpush1.msra.mxu0 0.0
      %2394 = vmatprep.subr.mxu0 0.0
      %2395 = vmatpush1.msra.mxu0 0.0
      %2396 = vmatprep.subr.mxu0 0.0
      %2397 = vmatpush1.msra.mxu0 0.0
      %2398 = vmatprep.subr.mxu0 0.0
      %2399 = vmatpush1.msra.mxu0 0.0
      %2400 = vmatprep.subr.mxu0 0.0
      %2401 = vmatpush1.msra.mxu0 0.0
      %2402 = vmatprep.subr.mxu0 0.0
      %2403 = vmatpush1.msra.mxu0 0.0
      %2404 = vmatprep.subr.mxu0 0.0
      %2405 = vmatpush1.msra.mxu0 0.0
      %2406 = vmatprep.subr.mxu0 0.0
      %2407 = vmatpush1.msra.mxu0 0.0
      %2408 = vmatprep.subr.mxu0 0.0
      %2409 = vmatpush1.msra.mxu0 0.0
      %2410 = vmatprep.subr.mxu0 0.0
      %2411 = vmatpush1.msra.mxu0 0.0
      %2412 = vmatprep.subr.mxu0 0.0
      %2413 = vmatpush1.msra.mxu0 0.0
      %2414 = vmatprep.subr.mxu0 0.0
      %2415 = vmatpush1.msra.mxu0 0.0
      %2416 = vmatprep.subr.mxu0 0.0
      %2417 = vmatpush1.msra.mxu0 0.0
      %2418 = vmatprep.subr.mxu0 0.0
      %2419 = vmatpush1.msra.mxu0 0.0
      %2420 = vmatprep.subr.mxu0 0.0
      %2421 = vmatpush1.msra.mxu0 0.0
      %2422 = vmatprep.subr.mxu0 0.0
      %2423 = vmatpush1.msra.mxu0 0.0
      %2424 = vmatprep.subr.mxu0 0.0
      %2425 = vmatpush1.msra.mxu0 0.0
      %2426 = vmatprep.subr.mxu0 0.0
      %2427 = vmatpush1.msra.mxu0 0.0
      %2428 = vmatprep.mubr.f32.mxu0 0.0
      %v2429 = vand.u32 %v1851, 4294901760
      %2430 = vmatmul.mubr.f32.gmra.mrb[0].mxu0 %v2429
      %v2431 = vpop.f32.mrb[0].mxu0
      %v2432 = vadd.f32 %v2306, %v2431
      %v2433 = vpop.f32.mrb[0].mxu0
      %v2434 = vadd.f32 %v2308, %v2433
      %2435 = vdwg.mxu0
      %v2436 = vand.u32 %v1828, 4294901760
      %2437 = vmatprep.subr.mxu0 %v2436
      %v2438 = vand.u32 %v1827, 4294901760
      %2439 = vmatpush1.msra.mxu0 %v2438
      %v2440 = vand.u32 %v1830, 4294901760
      %2441 = vmatprep.subr.mxu0 %v2440
      %v2442 = vand.u32 %v1829, 4294901760
      %2443 = vmatpush1.msra.mxu0 %v2442
      %v2444 = vand.u32 %v1832, 4294901760
      %2445 = vmatprep.subr.mxu0 %v2444
      %v2446 = vand.u32 %v1831, 4294901760
      %2447 = vmatpush1.msra.mxu0 %v2446
      %v2448 = vand.u32 %v1834, 4294901760
      %2449 = vmatprep.subr.mxu0 %v2448
      %v2450 = vand.u32 %v1833, 4294901760
      %2451 = vmatpush1.msra.mxu0 %v2450
      %v2452 = vand.u32 %v1836, 4294901760
      %2453 = vmatprep.subr.mxu0 %v2452
      %v2454 = vand.u32 %v1835, 4294901760
      %2455 = vmatpush1.msra.mxu0 %v2454
      %v2456 = vand.u32 %v1838, 4294901760
      %2457 = vmatprep.subr.mxu0 %v2456
      %v2458 = vand.u32 %v1837, 4294901760
      %2459 = vmatpush1.msra.mxu0 %v2458
      %v2460 = vand.u32 %v1840, 4294901760
      %2461 = vmatprep.subr.mxu0 %v2460
      %v2462 = vand.u32 %v1839, 4294901760
      %2463 = vmatpush1.msra.mxu0 %v2462
      %v2464 = vand.u32 %v1842, 4294901760
      %2465 = vmatprep.subr.mxu0 %v2464
      %v2466 = vand.u32 %v1841, 4294901760
      %2467 = vmatpush1.msra.mxu0 %v2466
      %v2468 = vand.u32 %v1844, 4294901760
      %2469 = vmatprep.subr.mxu0 %v2468
      %v2470 = vand.u32 %v1843, 4294901760
      %2471 = vmatpush1.msra.mxu0 %v2470
      %2472 = vmatprep.subr.mxu0 0.0
      %2473 = vmatpush1.msra.mxu0 0.0
      %2474 = vmatprep.subr.mxu0 0.0
      %2475 = vmatpush1.msra.mxu0 0.0
      %2476 = vmatprep.subr.mxu0 0.0
      %2477 = vmatpush1.msra.mxu0 0.0
      %2478 = vmatprep.subr.mxu0 0.0
      %2479 = vmatpush1.msra.mxu0 0.0
      %2480 = vmatprep.subr.mxu0 0.0
      %2481 = vmatpush1.msra.mxu0 0.0
      %2482 = vmatprep.subr.mxu0 0.0
      %2483 = vmatpush1.msra.mxu0 0.0
      %2484 = vmatprep.subr.mxu0 0.0
      %2485 = vmatpush1.msra.mxu0 0.0
      %2486 = vmatprep.subr.mxu0 0.0
      %2487 = vmatpush1.msra.mxu0 0.0
      %2488 = vmatprep.subr.mxu0 0.0
      %2489 = vmatpush1.msra.mxu0 0.0
      %2490 = vmatprep.subr.mxu0 0.0
      %2491 = vmatpush1.msra.mxu0 0.0
      %2492 = vmatprep.subr.mxu0 0.0
      %2493 = vmatpush1.msra.mxu0 0.0
      %2494 = vmatprep.subr.mxu0 0.0
      %2495 = vmatpush1.msra.mxu0 0.0
      %2496 = vmatprep.subr.mxu0 0.0
      %2497 = vmatpush1.msra.mxu0 0.0
      %2498 = vmatprep.subr.mxu0 0.0
      %2499 = vmatpush1.msra.mxu0 0.0
      %2500 = vmatprep.subr.mxu0 0.0
      %2501 = vmatpush1.msra.mxu0 0.0
      %2502 = vmatprep.subr.mxu0 0.0
      %2503 = vmatpush1.msra.mxu0 0.0
      %2504 = vmatprep.subr.mxu0 0.0
      %2505 = vmatpush1.msra.mxu0 0.0
      %2506 = vmatprep.subr.mxu0 0.0
      %2507 = vmatpush1.msra.mxu0 0.0
      %2508 = vmatprep.subr.mxu0 0.0
      %2509 = vmatpush1.msra.mxu0 0.0
      %2510 = vmatprep.subr.mxu0 0.0
      %2511 = vmatpush1.msra.mxu0 0.0
      %2512 = vmatprep.subr.mxu0 0.0
      %2513 = vmatpush1.msra.mxu0 0.0
      %2514 = vmatprep.subr.mxu0 0.0
      %2515 = vmatpush1.msra.mxu0 0.0
      %2516 = vmatprep.subr.mxu0 0.0
      %2517 = vmatpush1.msra.mxu0 0.0
      %2518 = vmatprep.mubr.f32.mxu0 0.0
      %v2519 = vand.u32 %v1851, 4294901760
      %2520 = vmatmul.mubr.f32.gmra.mrb[0].mxu0 %v2519
      %v2521 = vpop.f32.mrb[0].mxu0
      %v2522 = vadd.f32 %v2432, %v2521
      %v2523 = vpop.f32.mrb[0].mxu0
      %v2524 = vadd.f32 %v2434, %v2523
      %2525 = vdwg.mxu0
      %v2526 = vmax.f32 %v2522, 0.0
      %v2527 = vmax.f32 %v2524, 0.0
      %2528 = vst [vmem:[%s140] sm:$0xff] %v2526
      %2529 = vst [vmem:[%s140 + $0x8] sm:$0xff] %v2527
      %p2530 = scmp.lt.s32.totalorder %s13, 1
      %s2531 = scalar_select %p2530, %s13, 1
      %s2532 = smul.addr %s2531, 2
      %s2533 = smul.addr %s2532, 8
      %s2534 = scalar_lea.vmem %s2, %s2533
      // Predicated region
      $region29: #{a_call__.1} parent=27 // pred_check
        %p2535 = pneg %p78
      $region30: #{a_call__.1} parent=27 // pred_check_branch
        %2537 = sbr.rel (%p2535) target = $region32
      $region31: #{a_call__.1} parent=27 // pred_region
        _
      $region32: #{a_call__.1} parent=27 // pred_fallthru
        _
    $region28: #{a_call__.1} parent=5 // pred_fallthru
      _
    %p2538 = scmp.le.s32.totalorder 2, %s8
    // Predicated region
    $region33: #{a_call__.1} parent=5 // pred_check
      %p2539 = pneg %p2538
    $region34: #{a_call__.1} parent=5 // pred_check_branch
      %2541 = sbr.rel (%p2539) target = $region36
    $region35: #{a_call__.1} parent=5 // pred_region
      %s2542 = ssub.s32 %s8, 2
      // Predicated region
      $region37: #{a_call__.1} parent=35 // pred_check
        %p2543 = pneg %p84
      $region38: #{a_call__.1} parent=35 // pred_check_branch
        %2545 = sbr.rel (%p2543) target = $region40
      $region39: #{a_call__.1} parent=35 // pred_region
        %p2546 = scmp.lt.s32.totalorder %s14, 1
        %s2547 = scalar_select %p2546, %s14, 1
        %s2548 = smul.addr %s2547, 2
        %s2549 = smul.addr %s2548, 8
        %s2550 = scalar_lea.vmem %s2, %s2549
      $region40: #{a_call__.1} parent=35 // pred_fallthru
        _
    $region36: #{a_call__.1} parent=5 // pred_fallthru
      _
  $region6: #{a_call__.1} parent=0 // loop_footer
    %s12 = sadd.s32 1, %s8
  $region7: #{a_call__.1} parent=0 // loop_footer_branch
    %7 = sbr.rel target = $region3
  $region8: #{a_call__.1} parent=0 // loop_exit
    _

</llo_original>
